<compile_context>
chip_gen: v7x
topology: tpu7x:2x2x1
jax: 0.10.0
libtpu: 0.0.40
codegen_flags: <defaults>
</compile_context>

<pallas_src>
import numpy as np
import jax
import jax.numpy as jnp
from jax.experimental import pallas as pl
from jax.experimental.pallas import tpu as pltpu


def _round_up(x, m):
    return ((x + m - 1) // m) * m


# ------------------------------ fused kernel -------------------------------- #

def _make_decoder_kernel(n_layers, ep, hp):
    """Fused decode step: n_layers LSTM cells + vocab-tiled output projection.

    Refs (inputs, outputs, scratch), all padded:
      x_ref       [Bp, Ep]             bf16  embedded tokens
      h_in_ref    [L, Bp, Hp]          f32
      c_in_ref    [L, Bp, Hp]          f32
      per layer l:
        w_l_ref   [INp_l + Hp, 4*Hp]   bf16  [W_ih^T ; W_hh^T], gate-padded cols
        b_l_ref   [1, 4*Hp]            f32   b_ih + b_hh, gate-padded
      wout_ref    [Hp, TILE_V]         bf16  vocab tile of W_out^T
      bout_ref    [1, TILE_V]          f32
      pred_ref    [Bp, TILE_V]         f32   (out)
      h_out_ref   [L, Bp, Hp]          f32   (out, aliased with h_in)
      c_out_ref   [L, Bp, Hp]          f32   (out, aliased with c_in)
      hlast_ref   [Bp, Hp]             bf16  (scratch: last-layer hidden)

    Grid: (Vp // TILE_V,) over vocab tiles.  The LSTM stack runs only at
    tile 0; its result stays resident in `hlast_ref` (already bf16) for every
    projection tile.  Gate g occupies lanes [g*Hp, (g+1)*Hp).
    """
    def kernel(*refs):
        x_ref, h_in_ref, c_in_ref = refs[0:3]
        layer_refs = refs[3:3 + 2 * n_layers]
        wout_ref = refs[3 + 2 * n_layers]
        bout_ref = refs[4 + 2 * n_layers]
        pred_ref = refs[5 + 2 * n_layers]
        h_out_ref = refs[6 + 2 * n_layers]
        c_out_ref = refs[7 + 2 * n_layers]
        hlast_ref = refs[8 + 2 * n_layers]

        j = pl.program_id(0)

        @pl.when(j == 0)
        def _run_lstm_stack():
            x = x_ref[...]                                      # bf16 [Bp, INp]
            for l in range(n_layers):
                inp = ep if l == 0 else hp
                w_ref = layer_refs[2 * l]                       # bf16 [inp+Hp, 4Hp]
                b = layer_refs[2 * l + 1][...]                  # f32 [1, 4Hp]
                h = h_in_ref[l]                                 # f32 [Bp, Hp]
                c = c_in_ref[l]
                # Two tile-aligned dots (no [Bp, inp+Hp] concat temporary).
                gates = (
                    jnp.dot(x, w_ref[0:inp, :],
                            preferred_element_type=jnp.float32)
                    + jnp.dot(h.astype(jnp.bfloat16), w_ref[inp:inp + hp, :],
                              preferred_element_type=jnp.float32)
                    + b)
                i_g = jax.nn.sigmoid(gates[:, 0 * hp:1 * hp])
                f_g = jax.nn.sigmoid(gates[:, 1 * hp:2 * hp])
                g_g = jnp.tanh(gates[:, 2 * hp:3 * hp])
                o_g = jax.nn.sigmoid(gates[:, 3 * hp:4 * hp])
                c_new = f_g * c + i_g * g_g
                h_new = o_g * jnp.tanh(c_new)
                h_out_ref[l] = h_new
                c_out_ref[l] = c_new
                x = h_new.astype(jnp.bfloat16)   # inter-layer dropout = id
            # `x` is the bf16 last-layer hidden (valid even if n_layers == 0).
            hlast_ref[...] = x

        # Vocab-tiled projection; wout tile is pipelined by its BlockSpec.
        pred_ref[...] = (
            jnp.dot(hlast_ref[...], wout_ref[...],
                    preferred_element_type=jnp.float32)
            + bout_ref[...])

    return kernel


# --------------------------- VMEM budget / tiling ---------------------------- #

def _plan_tiles(L, Bp, Ep, Hp, Vp):
    """Budget-driven vocab tile size, W_out buffer depth and vmem limit."""
    # Conservative target that fits every generation (v7x physical VMEM = 64 MiB).
    VMEM_SAFE_CAP = 48 * 1024 * 1024

    # Resident bytes: single-buffered constant-index inputs + state + scratch
    # + double-buffered state outputs.
    resident = Bp * Ep * 2                      # embedded x (bf16)
    resident += 2 * L * Bp * Hp * 4             # h_in, c_in (f32)
    for l in range(L):
        inp = Ep if l == 0 else Hp
        resident += (inp + Hp) * (4 * Hp) * 2   # packed LSTM weights (bf16)
        resident += (4 * Hp) * 4                # bias (f32)
    resident += Bp * Hp * 2                     # hlast scratch (bf16)
    resident += 2 * 2 * L * Bp * Hp * 4         # h_out / c_out output buffers

    def moving_bytes(t, nbuf):
        # W_out bf16 tile + b_out f32 tile (nbuf-deep) + pred f32 tile (2-deep).
        return nbuf * (Hp * t * 2 + t * 4) + 2 * Bp * t * 4

    candidates = [t for t in range(min(Vp, 4096), 0, -128) if Vp % t == 0]
    tile_v, n_buf = 128, 2
    for t in candidates:
        nb = 3 if (Vp // t) >= 3 else 2         # deeper prefetch only if useful
        if resident + moving_bytes(t, nb) <= VMEM_SAFE_CAP:
            tile_v, n_buf = t, nb
            break
        if resident + moving_bytes(t, 2) <= VMEM_SAFE_CAP:
            tile_v, n_buf = t, 2
            break

    vmem_limit = int(min(64 * 1024 * 1024,
                         max(32 * 1024 * 1024,
                             resident + moving_bytes(tile_v, n_buf)
                             + 8 * 1024 * 1024)))
    return tile_v, n_buf, vmem_limit


# -------------------------------- wrapper ------------------------------------ #

def decoder_forward(params, token_ids, hidden_p, cell_p):
    """One decode step (inference), matching PyTorch Decoder.forward.

    `hidden_p` / `cell_p` are the PADDED state [L, Bp, Hp] (kept padded across
    decode steps so hidden/cell are updated in place via input_output_aliases).
    Returns (pred_padded [Bp, Vp], hidden_p, cell_p).
    """
    d = params["dims"]
    V, E, H, L = d["V"], d["E"], d["H"], d["L"]
    Vp, Ep, Hp = d["Vp"], d["Ep"], d["Hp"]
    B = token_ids.shape[0]
    Bp = hidden_p.shape[1]
    assert Bp >= B and Bp % 8 == 0

    tile_v, n_buf, vmem_limit = _plan_tiles(L, Bp, Ep, Hp, Vp)
    n_v_tiles = Vp // tile_v

    # Embedding lookup stays in XLA glue; table is already padded + bf16.
    ids_p = jnp.pad(token_ids, (0, Bp - B))
    x = jnp.take(params["embedding"], ids_p, axis=0)            # bf16 [Bp, Ep]

    args = [x, hidden_p, cell_p]
    in_specs = [
        pl.BlockSpec((Bp, Ep), lambda j: (0, 0),
                     pipeline_mode=pl.Buffered(1)),
        pl.BlockSpec((L, Bp, Hp), lambda j: (0, 0, 0),
                     pipeline_mode=pl.Buffered(1)),
        pl.BlockSpec((L, Bp, Hp), lambda j: (0, 0, 0),
                     pipeline_mode=pl.Buffered(1)),
    ]
    for l in range(L):
        w = params[f"w_{l}"]
        b = params[f"b_{l}"]
        args += [w, b]
        # Constant index_map + Buffered(1): each layer's weights are DMA'd once
        # and stay VMEM-resident (single buffer) across all vocab tiles.
        in_specs.append(pl.BlockSpec(w.shape, lambda j: (0, 0),
                                     pipeline_mode=pl.Buffered(1)))
        in_specs.append(pl.BlockSpec(b.shape, lambda j: (0, 0),
                                     pipeline_mode=pl.Buffered(1)))
    args += [params["w_out"], params["b_out"]]
    in_specs.append(pl.BlockSpec((Hp, tile_v), lambda j: (0, j),
                                 pipeline_mode=pl.Buffered(n_buf)))
    in_specs.append(pl.BlockSpec((1, tile_v), lambda j: (0, j),
                                 pipeline_mode=pl.Buffered(n_buf)))

    out_shape = (
        jax.ShapeDtypeStruct((Bp, Vp), jnp.float32),
        jax.ShapeDtypeStruct((L, Bp, Hp), jnp.float32),
        jax.ShapeDtypeStruct((L, Bp, Hp), jnp.float32),
    )
    out_specs = [
        pl.BlockSpec((Bp, tile_v), lambda j: (0, j)),       # lane-dense pred
        pl.BlockSpec((L, Bp, Hp), lambda j: (0, 0, 0)),
        pl.BlockSpec((L, Bp, Hp), lambda j: (0, 0, 0)),
    ]

    flops = 2 * Bp * Hp * Vp
    transcendentals = 0
    for l in range(L):
        inp = Ep if l == 0 else Hp
        flops += 2 * Bp * (inp + Hp) * 4 * Hp
        transcendentals += 5 * Bp * Hp
    bytes_accessed = sum(int(a.size) * a.dtype.itemsize for a in args)
    bytes_accessed += (Bp * Vp + 2 * L * Bp * Hp) * 4

    pred_p, h_out_p, c_out_p = pl.pallas_call(
        _make_decoder_kernel(L, Ep, Hp),
        out_shape=out_shape,
        grid_spec=pltpu.PrefetchScalarGridSpec(
            num_scalar_prefetch=0,
            grid=(n_v_tiles,),
            in_specs=in_specs,
            out_specs=out_specs,
            scratch_shapes=[pltpu.VMEM((Bp, Hp), jnp.bfloat16)],
        ),
        # Update hidden/cell in place (padded state persists across steps).
        input_output_aliases={1: 1, 2: 2},
        compiler_params=pltpu.CompilerParams(
            # Vocab axis must be "arbitrary": the LSTM stack runs only at
            # tile 0 and its hlast/state outputs stay resident across the axis.
            dimension_semantics=("arbitrary",),
            vmem_limit_bytes=vmem_limit),
        cost_estimate=pl.CostEstimate(
            flops=flops, transcendentals=transcendentals,
            bytes_accessed=bytes_accessed),
    )(*args)

    return pred_p, h_out_p, c_out_p


# --------------------------- parameter creation ------------------------------ #

def make_params(key, output_dim, emb_dim, hid_dim, n_layers):
    """PyTorch-initialized weights, packed/padded once into the kernel layout."""
    Ep = _round_up(emb_dim, 128)
    Hp = _round_up(hid_dim, 128)
    Vp = _round_up(output_dim, 128)
    k = float(1.0 / np.sqrt(hid_dim))
    keys = jax.random.split(key, 3 + 4 * n_layers)

    def uni(kk, shape):
        return np.asarray(jax.random.uniform(kk, shape, jnp.float32, -k, k))

    params = {"dims": dict(V=output_dim, E=emb_dim, H=hid_dim, L=n_layers,
                           Vp=Vp, Ep=Ep, Hp=Hp)}

    emb = np.asarray(jax.random.normal(keys[0], (output_dim, emb_dim),
                                       jnp.float32))
    emb_p = np.zeros((output_dim, Ep), np.float32)
    emb_p[:, :emb_dim] = emb
    params["embedding"] = jnp.asarray(emb_p, jnp.bfloat16)   # bf16 table

    for l in range(n_layers):
        in_dim = emb_dim if l == 0 else hid_dim
        inp = Ep if l == 0 else Hp
        kk = keys[1 + 4 * l: 1 + 4 * (l + 1)]
        w_ih = uni(kk[0], (4 * hid_dim, in_dim))       # PyTorch layout
        w_hh = uni(kk[1], (4 * hid_dim, hid_dim))
        b_ih = uni(kk[2], (4 * hid_dim,))
        b_hh = uni(kk[3], (4 * hid_dim,))
        wp = np.zeros((inp + Hp, 4 * Hp), np.float32)  # [W_ih^T ; W_hh^T]
        bp = np.zeros((1, 4 * Hp), np.float32)
        bsum = b_ih + b_hh
        for g in range(4):                             # gate order i, f, g, o
            wp[:in_dim, g * Hp:g * Hp + hid_dim] = \
                w_ih[g * hid_dim:(g + 1) * hid_dim, :].T
            wp[inp:inp + hid_dim, g * Hp:g * Hp + hid_dim] = \
                w_hh[g * hid_dim:(g + 1) * hid_dim, :].T
            bp[0, g * Hp:g * Hp + hid_dim] = bsum[g * hid_dim:(g + 1) * hid_dim]
        params[f"w_{l}"] = jnp.asarray(wp, jnp.bfloat16)
        params[f"b_{l}"] = jnp.asarray(bp)

    w_out = uni(keys[1 + 4 * n_layers], (output_dim, hid_dim))
    b_out = uni(keys[2 + 4 * n_layers], (output_dim,))
    wop = np.zeros((Hp, Vp), np.float32)
    wop[:hid_dim, :output_dim] = w_out.T
    bop = np.zeros((1, Vp), np.float32)
    bop[0, :output_dim] = b_out
    params["w_out"] = jnp.asarray(wop, jnp.bfloat16)
    params["b_out"] = jnp.asarray(bop)
    return params


def pad_state(hidden, cell, params):
    """Pad (L, B, H) state to the kernel's persistent (L, Bp, Hp) layout."""
    d = params["dims"]
    L, H, Hp = d["L"], d["H"], d["Hp"]
    B = hidden.shape[1]
    Bp = _round_up(B, 8)
    h_p = jnp.pad(hidden, ((0, 0), (0, Bp - B), (0, Hp - H)))
    c_p = jnp.pad(cell, ((0, 0), (0, Bp - B), (0, Hp - H)))
    return h_p, c_p


# --------------------------- pure-JAX reference ------------------------------ #

def decoder_reference(params, token_ids, hidden_p, cell_p):
    """Same padded math as the kernel, in plain jnp (correctness check)."""
    d = params["dims"]
    Ep, Hp, L = d["Ep"], d["Hp"], d["L"]
    B = token_ids.shape[0]
    Bp = hidden_p.shape[1]

    ids_p = jnp.pad(token_ids, (0, Bp - B))
    x = jnp.take(params["embedding"], ids_p, axis=0).astype(jnp.float32)

    hs, cs = [], []
    for l in range(L):
        inp = Ep if l == 0 else Hp
        w = params[f"w_{l}"].astype(jnp.float32)
        b = params[f"b_{l}"]
        h = hidden_p[l]
        c = cell_p[l]
        hb = h.astype(jnp.bfloat16).astype(jnp.float32)
        gates = x @ w[:inp, :] + hb @ w[inp:inp + Hp, :] + b
        i = jax.nn.sigmoid(gates[:, 0 * Hp:1 * Hp])
        f = jax.nn.sigmoid(gates[:, 1 * Hp:2 * Hp])
        g = jnp.tanh(gates[:, 2 * Hp:3 * Hp])
        o = jax.nn.sigmoid(gates[:, 3 * Hp:4 * Hp])
        c_new = f * c + i * g
        h_new = o * jnp.tanh(c_new)
        hs.append(h_new)
        cs.append(c_new)
        x = h_new.astype(jnp.bfloat16).astype(jnp.float32)

    pred = x @ params["w_out"].astype(jnp.float32) + params["b_out"]
    return pred, jnp.stack(hs), jnp.stack(cs)


# ----------------------------------- main ------------------------------------ #

if __name__ == "__main__":
    OUTPUT_DIM = 64   # vocab size
    EMB_DIM = 32
    HID_DIM = 32
    N_LAYERS = 2
    BATCH = 4

    key = jax.random.PRNGKey(0)
    kp, ki, kh, kc = jax.random.split(key, 4)

    params = make_params(kp, OUTPUT_DIM, EMB_DIM, HID_DIM, N_LAYERS)
    token_ids = jax.random.randint(ki, (BATCH,), 0, OUTPUT_DIM, jnp.int32)
    hidden = jax.random.normal(kh, (N_LAYERS, BATCH, HID_DIM), jnp.float32)
    cell = jax.random.normal(kc, (N_LAYERS, BATCH, HID_DIM), jnp.float32)

    # Persistent padded state (padded once, kept padded across decode steps).
    hidden_p, cell_p = pad_state(hidden, cell, params)

    # Run the pure-JAX reference BEFORE the kernel (kernel aliases/updates the
    # state buffers in place).
    pred_r_p, h_r_p, c_r_p = decoder_reference(params, token_ids, hidden_p, cell_p)

    pred_p, h_out_p, c_out_p = decoder_forward(params, token_ids, hidden_p, cell_p)
    jax.block_until_ready((pred_p, h_out_p, c_out_p))

    V, H, L = OUTPUT_DIM, HID_DIM, N_LAYERS
    pred = pred_p[:BATCH, :V]
    h_new = h_out_p[:, :BATCH, :H]
    c_new = c_out_p[:, :BATCH, :H]

    np.testing.assert_allclose(np.asarray(pred),
                               np.asarray(pred_r_p[:BATCH, :V]),
                               rtol=2e-3, atol=2e-3)
    np.testing.assert_allclose(np.asarray(h_new),
                               np.asarray(h_r_p[:, :BATCH, :H]),
                               rtol=2e-3, atol=2e-3)
    np.testing.assert_allclose(np.asarray(c_new),
                               np.asarray(c_r_p[:, :BATCH, :H]),
                               rtol=2e-3, atol=2e-3)

    assert pred.shape == (BATCH, OUTPUT_DIM)
    assert h_new.shape == (N_LAYERS, BATCH, HID_DIM)
    assert c_new.shape == (N_LAYERS, BATCH, HID_DIM)

    print("KERNEL_OK")
</pallas_src>

<mosaic_0001>
module attributes {stable_mosaic.version = 11 : i64} {
  func.func @kernel(%arg0: i32, %arg1: memref<8x128xbf16, #tpu.memory_space<vmem>>, %arg2: memref<2x8x128xf32, #tpu.memory_space<vmem>>, %arg3: memref<2x8x128xf32, #tpu.memory_space<vmem>>, %arg4: memref<256x512xbf16, #tpu.memory_space<vmem>>, %arg5: memref<1x512xf32, #tpu.memory_space<vmem>>, %arg6: memref<256x512xbf16, #tpu.memory_space<vmem>>, %arg7: memref<1x512xf32, #tpu.memory_space<vmem>>, %arg8: memref<128x128xbf16, #tpu.memory_space<vmem>>, %arg9: memref<1x128xf32, #tpu.memory_space<vmem>>, %arg10: memref<8x128xf32, #tpu.memory_space<vmem>>, %arg11: memref<2x8x128xf32, #tpu.memory_space<vmem>>, %arg12: memref<2x8x128xf32, #tpu.memory_space<vmem>>, %arg13: memref<8x128xbf16, #tpu.memory_space<vmem>>) attributes {dimension_semantics = [#tpu.dimension_semantics<arbitrary>], iteration_bounds = array<i64: 1>, scalar_prefetch = 0 : i64, scratch_operands = 1 : i64, tpu.core_type = #tpu.core_type<tc>, window_params = [{pipeline_mode = #tpu.pipeline_mode<synchronous>, transform_indices = @transform_0, window_bounds = array<i64: 8, 128>}, {pipeline_mode = #tpu.pipeline_mode<synchronous>, transform_indices = @transform_1, window_bounds = array<i64: 2, 8, 128>}, {pipeline_mode = #tpu.pipeline_mode<synchronous>, transform_indices = @transform_2, window_bounds = array<i64: 2, 8, 128>}, {pipeline_mode = #tpu.pipeline_mode<synchronous>, transform_indices = @transform_3, window_bounds = array<i64: 256, 512>}, {pipeline_mode = #tpu.pipeline_mode<synchronous>, transform_indices = @transform_4, window_bounds = array<i64: 1, 512>}, {pipeline_mode = #tpu.pipeline_mode<synchronous>, transform_indices = @transform_5, window_bounds = array<i64: 256, 512>}, {pipeline_mode = #tpu.pipeline_mode<synchronous>, transform_indices = @transform_6, window_bounds = array<i64: 1, 512>}, {pipeline_mode = #tpu.pipeline_mode<double_buffered>, transform_indices = @transform_7, window_bounds = array<i64: 128, 128>}, {pipeline_mode = #tpu.pipeline_mode<double_buffered>, transform_indices = @transform_8, window_bounds = array<i64: 1, 128>}, {transform_indices = @transform_9, window_bounds = array<i64: 8, 128>}, {pipeline_mode = #tpu.pipeline_mode<synchronous>, transform_indices = @transform_10, window_bounds = array<i64: 2, 8, 128>}, {pipeline_mode = #tpu.pipeline_mode<synchronous>, transform_indices = @transform_11, window_bounds = array<i64: 2, 8, 128>}]} {
    %c0_i32 = arith.constant 0 : i32
    %0 = arith.cmpi eq, %arg0, %c0_i32 : i32
    %1 = arith.extui %0 : i1 to i32
    %c0_i32_0 = arith.constant 0 : i32
    %2 = arith.cmpi ne, %1, %c0_i32_0 : i32
    scf.if %2 {
      %c0_8 = arith.constant 0 : index
      %c0_9 = arith.constant 0 : index
      %10 = vector.load %arg1[%c0_8, %c0_9] : memref<8x128xbf16, #tpu.memory_space<vmem>>, vector<8x128xbf16>
      %c0_10 = arith.constant 0 : index
      %c0_11 = arith.constant 0 : index
      %11 = vector.load %arg5[%c0_10, %c0_11] : memref<1x512xf32, #tpu.memory_space<vmem>>, vector<1x512xf32>
      %c0_12 = arith.constant 0 : index
      %c0_13 = arith.constant 0 : index
      %c0_14 = arith.constant 0 : index
      %12 = vector.load %arg2[%c0_12, %c0_13, %c0_14] : memref<2x8x128xf32, #tpu.memory_space<vmem>>, vector<1x8x128xf32>
      %13 = vector.shape_cast %12 : vector<1x8x128xf32> to vector<8x128xf32>
      %c0_15 = arith.constant 0 : index
      %c0_16 = arith.constant 0 : index
      %c0_17 = arith.constant 0 : index
      %14 = vector.load %arg3[%c0_15, %c0_16, %c0_17] : memref<2x8x128xf32, #tpu.memory_space<vmem>>, vector<1x8x128xf32>
      %15 = vector.shape_cast %14 : vector<1x8x128xf32> to vector<8x128xf32>
      %c0_18 = arith.constant 0 : index
      %c0_19 = arith.constant 0 : index
      %16 = vector.load %arg4[%c0_18, %c0_19] : memref<256x512xbf16, #tpu.memory_space<vmem>>, vector<128x512xbf16>
      %cst_20 = arith.constant dense<0.000000e+00> : vector<8x512xf32>
      %17 = tpu.matmul %10, %16, %cst_20 {dimension_numbers = #tpu.dot_dimension_numbers<[1], [0], [0], [1], [0, 0, 1, 1], [], []>} : vector<8x128xbf16>, vector<128x512xbf16>, vector<8x512xf32> -> vector<8x512xf32>
      %18 = arith.truncf %13 : vector<8x128xf32> to vector<8x128xbf16>
      %c128 = arith.constant 128 : index
      %c0_21 = arith.constant 0 : index
      %19 = vector.load %arg4[%c128, %c0_21] : memref<256x512xbf16, #tpu.memory_space<vmem>>, vector<128x512xbf16>
      %cst_22 = arith.constant dense<0.000000e+00> : vector<8x512xf32>
      %20 = tpu.matmul %18, %19, %cst_22 {dimension_numbers = #tpu.dot_dimension_numbers<[1], [0], [0], [1], [0, 0, 1, 1], [], []>} : vector<8x128xbf16>, vector<128x512xbf16>, vector<8x512xf32> -> vector<8x512xf32>
      %21 = arith.addf %17, %20 : vector<8x512xf32>
      %22 = vector.broadcast %11 : vector<1x512xf32> to vector<8x512xf32>
      %23 = arith.addf %21, %22 : vector<8x512xf32>
      %24 = vector.extract_strided_slice %23 {offsets = [0, 0], sizes = [8, 128], strides = [1, 1]} : vector<8x512xf32> to vector<8x128xf32>
      %25 = arith.negf %24 : vector<8x128xf32>
      %26 = math.exp %25 : vector<8x128xf32>
      %cst_23 = arith.constant 1.000000e+00 : f32
      %27 = vector.broadcast %cst_23 : f32 to vector<8x128xf32>
      %28 = arith.addf %27, %26 : vector<8x128xf32>
      %29 = arith.divf %27, %28 : vector<8x128xf32>
      %30 = vector.extract_strided_slice %23 {offsets = [0, 128], sizes = [8, 128], strides = [1, 1]} : vector<8x512xf32> to vector<8x128xf32>
      %31 = arith.negf %30 : vector<8x128xf32>
      %32 = math.exp %31 : vector<8x128xf32>
      %cst_24 = arith.constant 1.000000e+00 : f32
      %33 = vector.broadcast %cst_24 : f32 to vector<8x128xf32>
      %34 = arith.addf %33, %32 : vector<8x128xf32>
      %35 = arith.divf %33, %34 : vector<8x128xf32>
      %36 = vector.extract_strided_slice %23 {offsets = [0, 256], sizes = [8, 128], strides = [1, 1]} : vector<8x512xf32> to vector<8x128xf32>
      %37 = math.tanh %36 : vector<8x128xf32>
      %38 = vector.extract_strided_slice %23 {offsets = [0, 384], sizes = [8, 128], strides = [1, 1]} : vector<8x512xf32> to vector<8x128xf32>
      %39 = arith.negf %38 : vector<8x128xf32>
      %40 = math.exp %39 : vector<8x128xf32>
      %cst_25 = arith.constant 1.000000e+00 : f32
      %41 = vector.broadcast %cst_25 : f32 to vector<8x128xf32>
      %42 = arith.addf %41, %40 : vector<8x128xf32>
      %43 = arith.divf %41, %42 : vector<8x128xf32>
      %44 = arith.mulf %35, %15 : vector<8x128xf32>
      %45 = arith.mulf %29, %37 : vector<8x128xf32>
      %46 = arith.addf %44, %45 : vector<8x128xf32>
      %47 = math.tanh %46 : vector<8x128xf32>
      %48 = arith.mulf %43, %47 : vector<8x128xf32>
      %c0_26 = arith.constant 0 : index
      %c0_27 = arith.constant 0 : index
      %c0_28 = arith.constant 0 : index
      %49 = vector.load %arg11[%c0_26, %c0_27, %c0_28] : memref<2x8x128xf32, #tpu.memory_space<vmem>>, vector<1x8x128xf32>
      %50 = vector.shape_cast %49 : vector<1x8x128xf32> to vector<8x128xf32>
      %51 = vector.shape_cast %48 : vector<8x128xf32> to vector<1x8x128xf32>
      tpu.vector_store %arg11[%c0_26, %c0_27, %c0_28], %51 {strides = array<i32>} : memref<2x8x128xf32, #tpu.memory_space<vmem>>, vector<1x8x128xf32>,
      %c0_29 = arith.constant 0 : index
      %c0_30 = arith.constant 0 : index
      %c0_31 = arith.constant 0 : index
      %52 = vector.load %arg12[%c0_29, %c0_30, %c0_31] : memref<2x8x128xf32, #tpu.memory_space<vmem>>, vector<1x8x128xf32>
      %53 = vector.shape_cast %52 : vector<1x8x128xf32> to vector<8x128xf32>
      %54 = vector.shape_cast %46 : vector<8x128xf32> to vector<1x8x128xf32>
      tpu.vector_store %arg12[%c0_29, %c0_30, %c0_31], %54 {strides = array<i32>} : memref<2x8x128xf32, #tpu.memory_space<vmem>>, vector<1x8x128xf32>,
      %55 = arith.truncf %48 : vector<8x128xf32> to vector<8x128xbf16>
      %c0_32 = arith.constant 0 : index
      %c0_33 = arith.constant 0 : index
      %56 = vector.load %arg7[%c0_32, %c0_33] : memref<1x512xf32, #tpu.memory_space<vmem>>, vector<1x512xf32>
      %c1 = arith.constant 1 : index
      %c0_34 = arith.constant 0 : index
      %c0_35 = arith.constant 0 : index
      %57 = vector.load %arg2[%c1, %c0_34, %c0_35] : memref<2x8x128xf32, #tpu.memory_space<vmem>>, vector<1x8x128xf32>
      %58 = vector.shape_cast %57 : vector<1x8x128xf32> to vector<8x128xf32>
      %c1_36 = arith.constant 1 : index
      %c0_37 = arith.constant 0 : index
      %c0_38 = arith.constant 0 : index
      %59 = vector.load %arg3[%c1_36, %c0_37, %c0_38] : memref<2x8x128xf32, #tpu.memory_space<vmem>>, vector<1x8x128xf32>
      %60 = vector.shape_cast %59 : vector<1x8x128xf32> to vector<8x128xf32>
      %c0_39 = arith.constant 0 : index
      %c0_40 = arith.constant 0 : index
      %61 = vector.load %arg6[%c0_39, %c0_40] : memref<256x512xbf16, #tpu.memory_space<vmem>>, vector<128x512xbf16>
      %cst_41 = arith.constant dense<0.000000e+00> : vector<8x512xf32>
      %62 = tpu.matmul %55, %61, %cst_41 {dimension_numbers = #tpu.dot_dimension_numbers<[1], [0], [0], [1], [0, 0, 1, 1], [], []>} : vector<8x128xbf16>, vector<128x512xbf16>, vector<8x512xf32> -> vector<8x512xf32>
      %63 = arith.truncf %58 : vector<8x128xf32> to vector<8x128xbf16>
      %c128_42 = arith.constant 128 : index
      %c0_43 = arith.constant 0 : index
      %64 = vector.load %arg6[%c128_42, %c0_43] : memref<256x512xbf16, #tpu.memory_space<vmem>>, vector<128x512xbf16>
      %cst_44 = arith.constant dense<0.000000e+00> : vector<8x512xf32>
      %65 = tpu.matmul %63, %64, %cst_44 {dimension_numbers = #tpu.dot_dimension_numbers<[1], [0], [0], [1], [0, 0, 1, 1], [], []>} : vector<8x128xbf16>, vector<128x512xbf16>, vector<8x512xf32> -> vector<8x512xf32>
      %66 = arith.addf %62, %65 : vector<8x512xf32>
      %67 = vector.broadcast %56 : vector<1x512xf32> to vector<8x512xf32>
      %68 = arith.addf %66, %67 : vector<8x512xf32>
      %69 = vector.extract_strided_slice %68 {offsets = [0, 0], sizes = [8, 128], strides = [1, 1]} : vector<8x512xf32> to vector<8x128xf32>
      %70 = arith.negf %69 : vector<8x128xf32>
      %71 = math.exp %70 : vector<8x128xf32>
      %cst_45 = arith.constant 1.000000e+00 : f32
      %72 = vector.broadcast %cst_45 : f32 to vector<8x128xf32>
      %73 = arith.addf %72, %71 : vector<8x128xf32>
      %74 = arith.divf %72, %73 : vector<8x128xf32>
      %75 = vector.extract_strided_slice %68 {offsets = [0, 128], sizes = [8, 128], strides = [1, 1]} : vector<8x512xf32> to vector<8x128xf32>
      %76 = arith.negf %75 : vector<8x128xf32>
      %77 = math.exp %76 : vector<8x128xf32>
      %cst_46 = arith.constant 1.000000e+00 : f32
      %78 = vector.broadcast %cst_46 : f32 to vector<8x128xf32>
      %79 = arith.addf %78, %77 : vector<8x128xf32>
      %80 = arith.divf %78, %79 : vector<8x128xf32>
      %81 = vector.extract_strided_slice %68 {offsets = [0, 256], sizes = [8, 128], strides = [1, 1]} : vector<8x512xf32> to vector<8x128xf32>
      %82 = math.tanh %81 : vector<8x128xf32>
      %83 = vector.extract_strided_slice %68 {offsets = [0, 384], sizes = [8, 128], strides = [1, 1]} : vector<8x512xf32> to vector<8x128xf32>
      %84 = arith.negf %83 : vector<8x128xf32>
      %85 = math.exp %84 : vector<8x128xf32>
      %cst_47 = arith.constant 1.000000e+00 : f32
      %86 = vector.broadcast %cst_47 : f32 to vector<8x128xf32>
      %87 = arith.addf %86, %85 : vector<8x128xf32>
      %88 = arith.divf %86, %87 : vector<8x128xf32>
      %89 = arith.mulf %80, %60 : vector<8x128xf32>
      %90 = arith.mulf %74, %82 : vector<8x128xf32>
      %91 = arith.addf %89, %90 : vector<8x128xf32>
      %92 = math.tanh %91 : vector<8x128xf32>
      %93 = arith.mulf %88, %92 : vector<8x128xf32>
      %c1_48 = arith.constant 1 : index
      %c0_49 = arith.constant 0 : index
      %c0_50 = arith.constant 0 : index
      %94 = vector.load %arg11[%c1_48, %c0_49, %c0_50] : memref<2x8x128xf32, #tpu.memory_space<vmem>>, vector<1x8x128xf32>
      %95 = vector.shape_cast %94 : vector<1x8x128xf32> to vector<8x128xf32>
      %96 = vector.shape_cast %93 : vector<8x128xf32> to vector<1x8x128xf32>
      tpu.vector_store %arg11[%c1_48, %c0_49, %c0_50], %96 {strides = array<i32>} : memref<2x8x128xf32, #tpu.memory_space<vmem>>, vector<1x8x128xf32>,
      %c1_51 = arith.constant 1 : index
      %c0_52 = arith.constant 0 : index
      %c0_53 = arith.constant 0 : index
      %97 = vector.load %arg12[%c1_51, %c0_52, %c0_53] : memref<2x8x128xf32, #tpu.memory_space<vmem>>, vector<1x8x128xf32>
      %98 = vector.shape_cast %97 : vector<1x8x128xf32> to vector<8x128xf32>
      %99 = vector.shape_cast %91 : vector<8x128xf32> to vector<1x8x128xf32>
      tpu.vector_store %arg12[%c1_51, %c0_52, %c0_53], %99 {strides = array<i32>} : memref<2x8x128xf32, #tpu.memory_space<vmem>>, vector<1x8x128xf32>,
      %100 = arith.truncf %93 : vector<8x128xf32> to vector<8x128xbf16>
      %c0_54 = arith.constant 0 : index
      %c0_55 = arith.constant 0 : index
      %101 = vector.load %arg13[%c0_54, %c0_55] : memref<8x128xbf16, #tpu.memory_space<vmem>>, vector<8x128xbf16>
      tpu.vector_store %arg13[%c0_54, %c0_55], %100 {strides = array<i32>} : memref<8x128xbf16, #tpu.memory_space<vmem>>, vector<8x128xbf16>,
    } else {
    }
    %c0 = arith.constant 0 : index
    %c0_1 = arith.constant 0 : index
    %3 = vector.load %arg13[%c0, %c0_1] : memref<8x128xbf16, #tpu.memory_space<vmem>>, vector<8x128xbf16>
    %c0_2 = arith.constant 0 : index
    %c0_3 = arith.constant 0 : index
    %4 = vector.load %arg8[%c0_2, %c0_3] : memref<128x128xbf16, #tpu.memory_space<vmem>>, vector<128x128xbf16>
    %cst = arith.constant dense<0.000000e+00> : vector<8x128xf32>
    %5 = tpu.matmul %3, %4, %cst {dimension_numbers = #tpu.dot_dimension_numbers<[1], [0], [0], [1], [0, 0, 1, 1], [], []>} : vector<8x128xbf16>, vector<128x128xbf16>, vector<8x128xf32> -> vector<8x128xf32>
    %c0_4 = arith.constant 0 : index
    %c0_5 = arith.constant 0 : index
    %6 = vector.load %arg9[%c0_4, %c0_5] : memref<1x128xf32, #tpu.memory_space<vmem>>, vector<1x128xf32>
    %7 = vector.broadcast %6 : vector<1x128xf32> to vector<8x128xf32>
    %8 = arith.addf %5, %7 : vector<8x128xf32>
    %c0_6 = arith.constant 0 : index
    %c0_7 = arith.constant 0 : index
    %9 = vector.load %arg10[%c0_6, %c0_7] : memref<8x128xf32, #tpu.memory_space<vmem>>, vector<8x128xf32>
    tpu.vector_store %arg10[%c0_6, %c0_7], %8 {strides = array<i32>} : memref<8x128xf32, #tpu.memory_space<vmem>>, vector<8x128xf32>,
    return
  }
  func.func @transform_0(%arg0: i32) -> (i32, i32) {
    %c0_i32 = arith.constant 0 : i32
    %c0_i32_0 = arith.constant 0 : i32
    %c0_i32_1 = arith.constant 0 : i32
    return %c0_i32, %c0_i32_0 : i32, i32
  }
  func.func @transform_1(%arg0: i32) -> (i32, i32, i32) {
    %c0_i32 = arith.constant 0 : i32
    %c0_i32_0 = arith.constant 0 : i32
    %c0_i32_1 = arith.constant 0 : i32
    %c0_i32_2 = arith.constant 0 : i32
    return %c0_i32, %c0_i32_0, %c0_i32_1 : i32, i32, i32
  }
  func.func @transform_2(%arg0: i32) -> (i32, i32, i32) {
    %c0_i32 = arith.constant 0 : i32
    %c0_i32_0 = arith.constant 0 : i32
    %c0_i32_1 = arith.constant 0 : i32
    %c0_i32_2 = arith.constant 0 : i32
    return %c0_i32, %c0_i32_0, %c0_i32_1 : i32, i32, i32
  }
  func.func @transform_3(%arg0: i32) -> (i32, i32) {
    %c0_i32 = arith.constant 0 : i32
    %c0_i32_0 = arith.constant 0 : i32
    %c0_i32_1 = arith.constant 0 : i32
    return %c0_i32, %c0_i32_0 : i32, i32
  }
  func.func @transform_4(%arg0: i32) -> (i32, i32) {
    %c0_i32 = arith.constant 0 : i32
    %c0_i32_0 = arith.constant 0 : i32
    %c0_i32_1 = arith.constant 0 : i32
    return %c0_i32, %c0_i32_0 : i32, i32
  }
  func.func @transform_5(%arg0: i32) -> (i32, i32) {
    %c0_i32 = arith.constant 0 : i32
    %c0_i32_0 = arith.constant 0 : i32
    %c0_i32_1 = arith.constant 0 : i32
    return %c0_i32, %c0_i32_0 : i32, i32
  }
  func.func @transform_6(%arg0: i32) -> (i32, i32) {
    %c0_i32 = arith.constant 0 : i32
    %c0_i32_0 = arith.constant 0 : i32
    %c0_i32_1 = arith.constant 0 : i32
    return %c0_i32, %c0_i32_0 : i32, i32
  }
  func.func @transform_7(%arg0: i32) -> (i32, i32) {
    %c0_i32 = arith.constant 0 : i32
    %c0_i32_0 = arith.constant 0 : i32
    return %c0_i32, %arg0 : i32, i32
  }
  func.func @transform_8(%arg0: i32) -> (i32, i32) {
    %c0_i32 = arith.constant 0 : i32
    %c0_i32_0 = arith.constant 0 : i32
    return %c0_i32, %arg0 : i32, i32
  }
  func.func @transform_9(%arg0: i32) -> (i32, i32) {
    %c0_i32 = arith.constant 0 : i32
    %c0_i32_0 = arith.constant 0 : i32
    return %c0_i32, %arg0 : i32, i32
  }
  func.func @transform_10(%arg0: i32) -> (i32, i32, i32) {
    %c0_i32 = arith.constant 0 : i32
    %c0_i32_0 = arith.constant 0 : i32
    %c0_i32_1 = arith.constant 0 : i32
    %c0_i32_2 = arith.constant 0 : i32
    return %c0_i32, %c0_i32_0, %c0_i32_1 : i32, i32, i32
  }
  func.func @transform_11(%arg0: i32) -> (i32, i32, i32) {
    %c0_i32 = arith.constant 0 : i32
    %c0_i32_0 = arith.constant 0 : i32
    %c0_i32_1 = arith.constant 0 : i32
    %c0_i32_2 = arith.constant 0 : i32
    return %c0_i32, %c0_i32_0, %c0_i32_1 : i32, i32, i32
  }
}

</mosaic_0001>

<llo_original>
// kernel: tpu_custom_call.1
$region0: #{tpu_custom_call.1}
  #allocation0 [shape = 'u32[]', space=smem, size = 0x4, offset = 0x4, fixed_abs, tag = 'smem constant byte address 0x4 - core index']
  #allocation1 [shape = 'u32[144,128]{1,0:T(1,128)}', space=vmem, size = 0x12000, scoped, tag = 'internal scratch']
  #allocation2 [shape = 'bf16[8,128]{1,0:T(8,128)(2,1)}', space=vmem, size = 0x800, scoped, tag = 'scratch operand']
  %s0 = inlined_call_operand.vmem [shape: bf16[8,128], index: 0, kind: input, shape index: {}]
  %s1 = inlined_call_operand.hbm [shape: f32[2,8,128], index: 1, kind: input, shape index: {}, may-alias: {1,10}]
  %s2 = inlined_call_operand.hbm [shape: f32[2,8,128], index: 2, kind: input, shape index: {}, may-alias: {2,11}]
  %s3 = inlined_call_operand.hbm [shape: bf16[256,512], index: 3, kind: input, shape index: {}]
  %s4 = inlined_call_operand.hbm [shape: f32[1,512], index: 4, kind: input, shape index: {}]
  %s5 = inlined_call_operand.hbm [shape: bf16[256,512], index: 5, kind: input, shape index: {}]
  %s6 = inlined_call_operand.hbm [shape: f32[1,512], index: 6, kind: input, shape index: {}]
  %s7 = inlined_call_operand.vmem [shape: bf16[128,128], index: 7, kind: input, shape index: {}]
  %s8 = inlined_call_operand.vmem [shape: f32[1,128], index: 8, kind: input, shape index: {}]
  %s9 = inlined_call_operand.hbm [shape: f32[8,128], index: 9, kind: output, shape index: {0}]
  %s10 = inlined_call_operand.hbm [shape: f32[2,8,128], index: 10, kind: output, shape index: {1}, may-alias: {1,10}]
  %s11 = inlined_call_operand.hbm [shape: f32[2,8,128], index: 11, kind: output, shape index: {2}, may-alias: {2,11}]
  %12 = xla_tuple %s9, %s10, %s11
  %s13 = sld [smem:[#allocation0]]
  $region90: #{tpu_custom_call.1} parent=0
    _
  %s15 = ssub.s32 1, %s13
  %s16 = scalar_select 0, %s15, %s13
  $region1: #{tpu_custom_call.1} parent=0
    #allocation3 [shape = 'u8[8192]{0}', space=vmem, size = 0x2000, scoped, tag = 'input window, operand 1, single buffered']
    #allocation4 [shape = 's32[1]{0}', space=sflag, size = 0x4, scoped, tag = 'scoped memory for tpu_custom_call.1']
    #allocation5 [shape = 's32[1]{0}', space=sflag, size = 0x4, scoped, tag = 'scoped memory for tpu_custom_call.1']
    #allocation6 [shape = 'u8[8192]{0}', space=vmem, size = 0x2000, scoped, tag = 'input window, operand 2, single buffered']
    #allocation7 [shape = 's32[1]{0}', space=sflag, size = 0x4, scoped, tag = 'scoped memory for tpu_custom_call.1']
    #allocation8 [shape = 'u8[262144]{0}', space=vmem, size = 0x40000, scoped, tag = 'input window, operand 3, single buffered']
    #allocation9 [shape = 'u8[2048]{0}', space=vmem, size = 0x800, scoped, tag = 'input window, operand 4, single buffered']
    #allocation10 [shape = 's32[1]{0}', space=sflag, size = 0x4, scoped, tag = 'scoped memory for tpu_custom_call.1']
    #allocation11 [shape = 'u8[262144]{0}', space=vmem, size = 0x40000, scoped, tag = 'input window, operand 5, single buffered']
    #allocation12 [shape = 'u8[2048]{0}', space=vmem, size = 0x800, scoped, tag = 'input window, operand 6, single buffered']
    #allocation13 [shape = 's32[1]{0}', space=sflag, size = 0x4, scoped, tag = 'scoped memory for tpu_custom_call.1']
    #allocation14 [shape = 'u8[4096]{0}', space=vmem, size = 0x1000, scoped, tag = 'output window, operand 0, single buffered']
    #allocation15 [shape = 'u8[8192]{0}', space=vmem, size = 0x2000, scoped, tag = 'output window, operand 1, single buffered']
    #allocation16 [shape = 's32[1]{0}', space=sflag, size = 0x4, scoped, tag = 'scoped memory for tpu_custom_call.1']
    #allocation17 [shape = 'u8[8192]{0}', space=vmem, size = 0x2000, scoped, tag = 'output window, operand 2, single buffered']
    %17 = vsyncpa [#allocation4], 0
    %18 = vsyncpa [#allocation7], 0
    %19 = vsyncpa [#allocation10], 0
    %20 = vsyncpa [#allocation13], 0
    %21 = vsyncpa [#allocation5], 0
    %22 = vsyncpa [#allocation16], 0
    // Predicated region
    $region2: #{tpu_custom_call.1} parent=1 // pred_check
      _
    $region3: #{tpu_custom_call.1} parent=1 // pred_check_branch
      %24 = sbr.rel (0) target = $region5
    $region4: #{tpu_custom_call.1} parent=1 // pred_region
      _
    $region5: #{tpu_custom_call.1} parent=1 // pred_fallthru
      _
    // Predicated region
    $region6: #{tpu_custom_call.1} parent=1 // pred_check
      _
    $region7: #{tpu_custom_call.1} parent=1 // pred_check_branch
      %26 = sbr.rel (0) target = $region9
    $region8: #{tpu_custom_call.1} parent=1 // pred_region
      %s28 = ssub.s32 256, 256
      %29 = vsyncadd [#allocation4], %s28
      %s30 = sshll.u32 [#allocation3], 4
      %s31 = int_to_ptr.vmem [resolvable:$true] %s30
      %36 = dma.hbm_to_vmem [thread:$0]  %s1, 256, %s31, [#allocation4], 128, 128, 8
    $region9: #{tpu_custom_call.1} parent=1 // pred_fallthru
      _
    // Predicated region
    $region10: #{tpu_custom_call.1} parent=1 // pred_check
      _
    $region11: #{tpu_custom_call.1} parent=1 // pred_check_branch
      %38 = sbr.rel (0) target = $region13
    $region12: #{tpu_custom_call.1} parent=1 // pred_region
      %s40 = ssub.s32 256, 256
      %41 = vsyncadd [#allocation7], %s40
      %s42 = sshll.u32 [#allocation6], 4
      %s43 = int_to_ptr.vmem [resolvable:$true] %s42
      %48 = dma.hbm_to_vmem [thread:$0]  %s2, 256, %s43, [#allocation7], 128, 128, 8
    $region13: #{tpu_custom_call.1} parent=1 // pred_fallthru
      _
    // Predicated region
    $region14: #{tpu_custom_call.1} parent=1 // pred_check
      _
    $region15: #{tpu_custom_call.1} parent=1 // pred_check_branch
      %50 = sbr.rel (0) target = $region17
    $region16: #{tpu_custom_call.1} parent=1 // pred_region
      %s52 = ssub.s32 8192, 8192
      %53 = vsyncadd [#allocation7], %s52
      %s54 = sshll.u32 [#allocation8], 4
      %s55 = int_to_ptr.vmem [resolvable:$true] %s54
      %60 = dma.hbm_to_vmem [thread:$0]  %s3, 8192, %s55, [#allocation7], 256, 256, 16
    $region17: #{tpu_custom_call.1} parent=1 // pred_fallthru
      _
    // Predicated region
    $region18: #{tpu_custom_call.1} parent=1 // pred_check
      _
    $region19: #{tpu_custom_call.1} parent=1 // pred_check_branch
      %62 = sbr.rel (0) target = $region21
    $region20: #{tpu_custom_call.1} parent=1 // pred_region
      %s64 = ssub.s32 64, 64
      %65 = vsyncadd [#allocation10], %s64
      %s67 = sshll.u32 [#allocation9], 4
      %s68 = int_to_ptr.vmem [resolvable:$true] %s67
      %70 = dma.hbm_to_vmem [thread:$0]  %s4, 64, %s68, [#allocation10]
    $region21: #{tpu_custom_call.1} parent=1 // pred_fallthru
      _
    // Predicated region
    $region22: #{tpu_custom_call.1} parent=1 // pred_check
      _
    $region23: #{tpu_custom_call.1} parent=1 // pred_check_branch
      %72 = sbr.rel (0) target = $region25
    $region24: #{tpu_custom_call.1} parent=1 // pred_region
      %s74 = ssub.s32 8192, 8192
      %75 = vsyncadd [#allocation10], %s74
      %s76 = sshll.u32 [#allocation11], 4
      %s77 = int_to_ptr.vmem [resolvable:$true] %s76
      %82 = dma.hbm_to_vmem [thread:$0]  %s5, 8192, %s77, [#allocation10], 256, 256, 16
    $region25: #{tpu_custom_call.1} parent=1 // pred_fallthru
      _
    // Predicated region
    $region26: #{tpu_custom_call.1} parent=1 // pred_check
      _
    $region27: #{tpu_custom_call.1} parent=1 // pred_check_branch
      %84 = sbr.rel (0) target = $region29
    $region28: #{tpu_custom_call.1} parent=1 // pred_region
      %s86 = ssub.s32 64, 64
      %87 = vsyncadd [#allocation13], %s86
      %s89 = sshll.u32 [#allocation12], 4
      %s90 = int_to_ptr.vmem [resolvable:$true] %s89
      %92 = dma.hbm_to_vmem [thread:$0]  %s6, 64, %s90, [#allocation13]
    $region29: #{tpu_custom_call.1} parent=1 // pred_fallthru
      _
    // Predicated region
    $region30: #{tpu_custom_call.1} parent=1 // pred_check
      _
    $region31: #{tpu_custom_call.1} parent=1 // pred_check_branch
      %94 = sbr.rel (0) target = $region33
    $region32: #{tpu_custom_call.1} parent=1 // pred_region
      _
    $region33: #{tpu_custom_call.1} parent=1 // pred_fallthru
      _
    // Predicated region
    $region34: #{tpu_custom_call.1} parent=1 // pred_check
      _
    $region35: #{tpu_custom_call.1} parent=1 // pred_check_branch
      %96 = sbr.rel (0) target = $region37
    $region36: #{tpu_custom_call.1} parent=1 // pred_region
      _
    $region37: #{tpu_custom_call.1} parent=1 // pred_fallthru
      _
    // Predicated region
    $region38: #{tpu_custom_call.1} parent=1 // pred_check
      _
    $region39: #{tpu_custom_call.1} parent=1 // pred_check_branch
      %98 = sbr.rel (0) target = $region41
    $region40: #{tpu_custom_call.1} parent=1 // pred_region
      %99 = dma.done [#allocation4], 256
    $region41: #{tpu_custom_call.1} parent=1 // pred_fallthru
      _
    // Predicated region
    $region42: #{tpu_custom_call.1} parent=1 // pred_check
      _
    $region43: #{tpu_custom_call.1} parent=1 // pred_check_branch
      %101 = sbr.rel (0) target = $region45
    $region44: #{tpu_custom_call.1} parent=1 // pred_region
      %102 = dma.done [#allocation7], 256
    $region45: #{tpu_custom_call.1} parent=1 // pred_fallthru
      _
    // Predicated region
    $region46: #{tpu_custom_call.1} parent=1 // pred_check
      _
    $region47: #{tpu_custom_call.1} parent=1 // pred_check_branch
      %104 = sbr.rel (0) target = $region49
    $region48: #{tpu_custom_call.1} parent=1 // pred_region
      %105 = dma.done [#allocation7], 8192
    $region49: #{tpu_custom_call.1} parent=1 // pred_fallthru
      _
    // Predicated region
    $region50: #{tpu_custom_call.1} parent=1 // pred_check
      _
    $region51: #{tpu_custom_call.1} parent=1 // pred_check_branch
      %107 = sbr.rel (0) target = $region53
    $region52: #{tpu_custom_call.1} parent=1 // pred_region
      %108 = dma.done [#allocation10], 64
    $region53: #{tpu_custom_call.1} parent=1 // pred_fallthru
      _
    // Predicated region
    $region54: #{tpu_custom_call.1} parent=1 // pred_check
      _
    $region55: #{tpu_custom_call.1} parent=1 // pred_check_branch
      %110 = sbr.rel (0) target = $region57
    $region56: #{tpu_custom_call.1} parent=1 // pred_region
      %111 = dma.done [#allocation10], 8192
    $region57: #{tpu_custom_call.1} parent=1 // pred_fallthru
      _
    // Predicated region
    $region58: #{tpu_custom_call.1} parent=1 // pred_check
      _
    $region59: #{tpu_custom_call.1} parent=1 // pred_check_branch
      %113 = sbr.rel (0) target = $region61
    $region60: #{tpu_custom_call.1} parent=1 // pred_region
      %114 = dma.done [#allocation13], 64
    $region61: #{tpu_custom_call.1} parent=1 // pred_fallthru
      _
    %p116 = scmp.eq.s32.totalorder 0, 0
    // Predicated region
    $region62: #{tpu_custom_call.1} parent=1 // pred_check
      %p117 = pneg %p116
    $region63: #{tpu_custom_call.1} parent=1 // pred_check_branch
      %119 = sbr.rel (%p117) target = $region65
    $region64: #{tpu_custom_call.1} parent=1 // pred_region
      %v120 = vld [vmem:[%s0] sm:$0xf]
      %v121 = vld [vmem:[#allocation9] sm:$0xf]
      %v122 = vld [vmem:[#allocation3] sm:$0xff]
      %v123 = vld [vmem:[#allocation6] sm:$0xff]
      %v124 = vld [vmem:[#allocation8] sm:$0xff]
      %v125 = vld [vmem:[#allocation8 + $0x8] sm:$0xff]
      %v126 = vld [vmem:[#allocation8 + $0x10] sm:$0xff]
      %v127 = vld [vmem:[#allocation8 + $0x18] sm:$0xff]
      %v128 = vld [vmem:[#allocation8 + $0x20] sm:$0xff]
      %v129 = vld [vmem:[#allocation8 + $0x28] sm:$0xff]
      %v130 = vld [vmem:[#allocation8 + $0x30] sm:$0xff]
      %v131 = vld [vmem:[#allocation8 + $0x38] sm:$0xff]
      %v132 = vld [vmem:[#allocation8 + $0x40] sm:$0xff]
      %v133 = vld [vmem:[#allocation8 + $0x48] sm:$0xff]
      %v134 = vld [vmem:[#allocation8 + $0x50] sm:$0xff]
      %v135 = vld [vmem:[#allocation8 + $0x58] sm:$0xff]
      %v136 = vld [vmem:[#allocation8 + $0x60] sm:$0xff]
      %v137 = vld [vmem:[#allocation8 + $0x68] sm:$0xff]
      %v138 = vld [vmem:[#allocation8 + $0x70] sm:$0xff]
      %v139 = vld [vmem:[#allocation8 + $0x78] sm:$0xff]
      %v140 = vld [vmem:[#allocation8 + $0x80] sm:$0xff]
      %v141 = vld [vmem:[#allocation8 + $0x88] sm:$0xff]
      %v142 = vld [vmem:[#allocation8 + $0x90] sm:$0xff]
      %v143 = vld [vmem:[#allocation8 + $0x98] sm:$0xff]
      %v144 = vld [vmem:[#allocation8 + $0xa0] sm:$0xff]
      %v145 = vld [vmem:[#allocation8 + $0xa8] sm:$0xff]
      %v146 = vld [vmem:[#allocation8 + $0xb0] sm:$0xff]
      %v147 = vld [vmem:[#allocation8 + $0xb8] sm:$0xff]
      %v148 = vld [vmem:[#allocation8 + $0xc0] sm:$0xff]
      %v149 = vld [vmem:[#allocation8 + $0xc8] sm:$0xff]
      %v150 = vld [vmem:[#allocation8 + $0xd0] sm:$0xff]
      %v151 = vld [vmem:[#allocation8 + $0xd8] sm:$0xff]
      %v152 = vld [vmem:[#allocation8 + $0xe0] sm:$0xff]
      %v153 = vld [vmem:[#allocation8 + $0xe8] sm:$0xff]
      %v154 = vld [vmem:[#allocation8 + $0xf0] sm:$0xff]
      %v155 = vld [vmem:[#allocation8 + $0xf8] sm:$0xff]
      %v156 = vpack.c.bf16 %v122, %v122
      %v157 = vld [vmem:[#allocation8 + $0x100] sm:$0xff]
      %v158 = vld [vmem:[#allocation8 + $0x108] sm:$0xff]
      %v159 = vld [vmem:[#allocation8 + $0x110] sm:$0xff]
      %v160 = vld [vmem:[#allocation8 + $0x118] sm:$0xff]
      %v161 = vld [vmem:[#allocation8 + $0x120] sm:$0xff]
      %v162 = vld [vmem:[#allocation8 + $0x128] sm:$0xff]
      %v163 = vld [vmem:[#allocation8 + $0x130] sm:$0xff]
      %v164 = vld [vmem:[#allocation8 + $0x138] sm:$0xff]
      %v165 = vld [vmem:[#allocation8 + $0x140] sm:$0xff]
      %v166 = vld [vmem:[#allocation8 + $0x148] sm:$0xff]
      %v167 = vld [vmem:[#allocation8 + $0x150] sm:$0xff]
      %v168 = vld [vmem:[#allocation8 + $0x158] sm:$0xff]
      %v169 = vld [vmem:[#allocation8 + $0x160] sm:$0xff]
      %v170 = vld [vmem:[#allocation8 + $0x168] sm:$0xff]
      %v171 = vld [vmem:[#allocation8 + $0x170] sm:$0xff]
      %v172 = vld [vmem:[#allocation8 + $0x178] sm:$0xff]
      %v173 = vld [vmem:[#allocation8 + $0x180] sm:$0xff]
      %v174 = vld [vmem:[#allocation8 + $0x188] sm:$0xff]
      %v175 = vld [vmem:[#allocation8 + $0x190] sm:$0xff]
      %v176 = vld [vmem:[#allocation8 + $0x198] sm:$0xff]
      %v177 = vld [vmem:[#allocation8 + $0x1a0] sm:$0xff]
      %v178 = vld [vmem:[#allocation8 + $0x1a8] sm:$0xff]
      %v179 = vld [vmem:[#allocation8 + $0x1b0] sm:$0xff]
      %v180 = vld [vmem:[#allocation8 + $0x1b8] sm:$0xff]
      %v181 = vld [vmem:[#allocation8 + $0x1c0] sm:$0xff]
      %v182 = vld [vmem:[#allocation8 + $0x1c8] sm:$0xff]
      %v183 = vld [vmem:[#allocation8 + $0x1d0] sm:$0xff]
      %v184 = vld [vmem:[#allocation8 + $0x1d8] sm:$0xff]
      %v185 = vld [vmem:[#allocation8 + $0x1e0] sm:$0xff]
      %v186 = vld [vmem:[#allocation8 + $0x1e8] sm:$0xff]
      %v187 = vld [vmem:[#allocation8 + $0x1f0] sm:$0xff]
      %v188 = vld [vmem:[#allocation8 + $0x1f8] sm:$0xff]
      %v221 = vunpack.c.l.b16 %v157
      %v222 = vunpack.c.h.b16 %v157
      %v223 = vunpack.c.l.b16 %v158
      %v224 = vunpack.c.h.b16 %v158
      %v225 = vunpack.c.l.b16 %v159
      %v226 = vunpack.c.h.b16 %v159
      %v227 = vunpack.c.l.b16 %v160
      %v228 = vunpack.c.h.b16 %v160
      %v229 = vunpack.c.l.b16 %v161
      %v230 = vunpack.c.h.b16 %v161
      %v231 = vunpack.c.l.b16 %v162
      %v232 = vunpack.c.h.b16 %v162
      %v233 = vunpack.c.l.b16 %v163
      %v234 = vunpack.c.h.b16 %v163
      %v235 = vunpack.c.l.b16 %v164
      %v236 = vunpack.c.h.b16 %v164
      %v237 = vunpack.c.l.b16 %v165
      %v238 = vunpack.c.h.b16 %v165
      %v239 = vunpack.c.l.b16 %v166
      %v240 = vunpack.c.h.b16 %v166
      %v241 = vunpack.c.l.b16 %v167
      %v242 = vunpack.c.h.b16 %v167
      %v243 = vunpack.c.l.b16 %v168
      %v244 = vunpack.c.h.b16 %v168
      %v245 = vunpack.c.l.b16 %v169
      %v246 = vunpack.c.h.b16 %v169
      %v247 = vunpack.c.l.b16 %v170
      %v248 = vunpack.c.h.b16 %v170
      %v249 = vunpack.c.l.b16 %v171
      %v250 = vunpack.c.h.b16 %v171
      %v251 = vunpack.c.l.b16 %v172
      %v252 = vunpack.c.h.b16 %v172
      %v253 = vunpack.c.l.b16 %v173
      %v254 = vunpack.c.h.b16 %v173
      %v255 = vunpack.c.l.b16 %v174
      %v256 = vunpack.c.h.b16 %v174
      %v257 = vunpack.c.l.b16 %v175
      %v258 = vunpack.c.h.b16 %v175
      %v259 = vunpack.c.l.b16 %v176
      %v260 = vunpack.c.h.b16 %v176
      %v261 = vunpack.c.l.b16 %v177
      %v262 = vunpack.c.h.b16 %v177
      %v263 = vunpack.c.l.b16 %v178
      %v264 = vunpack.c.h.b16 %v178
      %v265 = vunpack.c.l.b16 %v179
      %v266 = vunpack.c.h.b16 %v179
      %v267 = vunpack.c.l.b16 %v180
      %v268 = vunpack.c.h.b16 %v180
      %v269 = vunpack.c.l.b16 %v181
      %v270 = vunpack.c.h.b16 %v181
      %v271 = vunpack.c.l.b16 %v182
      %v272 = vunpack.c.h.b16 %v182
      %v273 = vunpack.c.l.b16 %v183
      %v274 = vunpack.c.h.b16 %v183
      %v275 = vunpack.c.l.b16 %v184
      %v276 = vunpack.c.h.b16 %v184
      %v277 = vunpack.c.l.b16 %v185
      %v278 = vunpack.c.h.b16 %v185
      %v279 = vunpack.c.l.b16 %v186
      %v280 = vunpack.c.h.b16 %v186
      %v281 = vunpack.c.l.b16 %v187
      %v282 = vunpack.c.h.b16 %v187
      %v283 = vunpack.c.l.b16 %v188
      %v284 = vunpack.c.h.b16 %v188
      %v285 = vpack.c.b16 %v225, %v221
      %v286 = vpack.c.b16 %v226, %v222
      %v287 = vpack.c.b16 %v227, %v223
      %v288 = vpack.c.b16 %v228, %v224
      %v289 = vpack.c.b16 %v233, %v229
      %v290 = vpack.c.b16 %v234, %v230
      %v291 = vpack.c.b16 %v235, %v231
      %v292 = vpack.c.b16 %v236, %v232
      %v293 = vpack.c.b16 %v241, %v237
      %v294 = vpack.c.b16 %v242, %v238
      %v295 = vpack.c.b16 %v243, %v239
      %v296 = vpack.c.b16 %v244, %v240
      %v297 = vpack.c.b16 %v249, %v245
      %v298 = vpack.c.b16 %v250, %v246
      %v299 = vpack.c.b16 %v251, %v247
      %v300 = vpack.c.b16 %v252, %v248
      %v301 = vpack.c.b16 %v257, %v253
      %v302 = vpack.c.b16 %v258, %v254
      %v303 = vpack.c.b16 %v259, %v255
      %v304 = vpack.c.b16 %v260, %v256
      %v305 = vpack.c.b16 %v265, %v261
      %v306 = vpack.c.b16 %v266, %v262
      %v307 = vpack.c.b16 %v267, %v263
      %v308 = vpack.c.b16 %v268, %v264
      %v309 = vpack.c.b16 %v273, %v269
      %v310 = vpack.c.b16 %v274, %v270
      %v311 = vpack.c.b16 %v275, %v271
      %v312 = vpack.c.b16 %v276, %v272
      %v313 = vpack.c.b16 %v281, %v277
      %v314 = vpack.c.b16 %v282, %v278
      %v315 = vpack.c.b16 %v283, %v279
      %v316 = vpack.c.b16 %v284, %v280
      %349 = vmatprep.subr.bf16.mxu0 %v286
      %350 = vmatpush1.bf16.msra.mxu0 %v285
      %351 = vmatprep.subr.bf16.mxu0 %v290
      %352 = vmatpush1.bf16.msra.mxu0 %v289
      %353 = vmatprep.subr.bf16.mxu0 %v294
      %354 = vmatpush1.bf16.msra.mxu0 %v293
      %355 = vmatprep.subr.bf16.mxu0 %v298
      %356 = vmatpush1.bf16.msra.mxu0 %v297
      %357 = vmatprep.subr.bf16.mxu0 %v302
      %358 = vmatpush1.bf16.msra.mxu0 %v301
      %359 = vmatprep.subr.bf16.mxu0 %v306
      %360 = vmatpush1.bf16.msra.mxu0 %v305
      %361 = vmatprep.subr.bf16.mxu0 %v310
      %362 = vmatpush1.bf16.msra.mxu0 %v309
      %363 = vmatprep.subr.bf16.mxu0 %v314
      %364 = vmatpush1.bf16.msra.mxu0 %v313
      %365 = vmatprep.subr.bf16.mxu0 0
      %366 = vmatpush1.bf16.msra.mxu0 0
      %367 = vmatprep.subr.bf16.mxu0 0
      %368 = vmatpush1.bf16.msra.mxu0 0
      %369 = vmatprep.subr.bf16.mxu0 0
      %370 = vmatpush1.bf16.msra.mxu0 0
      %371 = vmatprep.subr.bf16.mxu0 0
      %372 = vmatpush1.bf16.msra.mxu0 0
      %373 = vmatprep.subr.bf16.mxu0 0
      %374 = vmatpush1.bf16.msra.mxu0 0
      %375 = vmatprep.subr.bf16.mxu0 0
      %376 = vmatpush1.bf16.msra.mxu0 0
      %377 = vmatprep.subr.bf16.mxu0 0
      %378 = vmatpush1.bf16.msra.mxu0 0
      %379 = vmatprep.subr.bf16.mxu0 0
      %380 = vmatpush1.bf16.msra.mxu0 0
      %381 = vmatprep.mubr.bf16.mxu0 0
      %382 = vmatmul.mubr.bf16.gmra.mrb[0].mxu0 %v156
      %v383 = vpop.f32.mrb[0].mxu0
      %v384 = vadd.f32 0.0, %v383
      %v385 = vpop.f32.mrb[0].mxu0
      %v386 = vadd.f32 0.0, %v385
      %v387 = vpop.f32.mrb[0].mxu0
      %v388 = vpop.f32.mrb[0].mxu0
      %389 = vdwg.mxu0
      %390 = vmatprep.subr.bf16.mxu0 %v288
      %391 = vmatpush1.bf16.msra.mxu0 %v287
      %392 = vmatprep.subr.bf16.mxu0 %v292
      %393 = vmatpush1.bf16.msra.mxu0 %v291
      %394 = vmatprep.subr.bf16.mxu0 %v296
      %395 = vmatpush1.bf16.msra.mxu0 %v295
      %396 = vmatprep.subr.bf16.mxu0 %v300
      %397 = vmatpush1.bf16.msra.mxu0 %v299
      %398 = vmatprep.subr.bf16.mxu0 %v304
      %399 = vmatpush1.bf16.msra.mxu0 %v303
      %400 = vmatprep.subr.bf16.mxu0 %v308
      %401 = vmatpush1.bf16.msra.mxu0 %v307
      %402 = vmatprep.subr.bf16.mxu0 %v312
      %403 = vmatpush1.bf16.msra.mxu0 %v311
      %404 = vmatprep.subr.bf16.mxu0 %v316
      %405 = vmatpush1.bf16.msra.mxu0 %v315
      %406 = vmatprep.subr.bf16.mxu0 0
      %407 = vmatpush1.bf16.msra.mxu0 0
      %408 = vmatprep.subr.bf16.mxu0 0
      %409 = vmatpush1.bf16.msra.mxu0 0
      %410 = vmatprep.subr.bf16.mxu0 0
      %411 = vmatpush1.bf16.msra.mxu0 0
      %412 = vmatprep.subr.bf16.mxu0 0
      %413 = vmatpush1.bf16.msra.mxu0 0
      %414 = vmatprep.subr.bf16.mxu0 0
      %415 = vmatpush1.bf16.msra.mxu0 0
      %416 = vmatprep.subr.bf16.mxu0 0
      %417 = vmatpush1.bf16.msra.mxu0 0
      %418 = vmatprep.subr.bf16.mxu0 0
      %419 = vmatpush1.bf16.msra.mxu0 0
      %420 = vmatprep.subr.bf16.mxu0 0
      %421 = vmatpush1.bf16.msra.mxu0 0
      %422 = vmatprep.mubr.bf16.mxu0 0
      %423 = vmatmul.mubr.bf16.gmra.mrb[0].mxu0 %v156
      %v424 = vpop.f32.mrb[0].mxu0
      %v425 = vadd.f32 0.0, %v424
      %v426 = vpop.f32.mrb[0].mxu0
      %v427 = vadd.f32 0.0, %v426
      %v428 = vpop.f32.mrb[0].mxu0
      %v429 = vpop.f32.mrb[0].mxu0
      %430 = vdwg.mxu0
      %v463 = vunpack.c.l.b16 %v124
      %v464 = vunpack.c.h.b16 %v124
      %v465 = vunpack.c.l.b16 %v125
      %v466 = vunpack.c.h.b16 %v125
      %v467 = vunpack.c.l.b16 %v126
      %v468 = vunpack.c.h.b16 %v126
      %v469 = vunpack.c.l.b16 %v127
      %v470 = vunpack.c.h.b16 %v127
      %v471 = vunpack.c.l.b16 %v128
      %v472 = vunpack.c.h.b16 %v128
      %v473 = vunpack.c.l.b16 %v129
      %v474 = vunpack.c.h.b16 %v129
      %v475 = vunpack.c.l.b16 %v130
      %v476 = vunpack.c.h.b16 %v130
      %v477 = vunpack.c.l.b16 %v131
      %v478 = vunpack.c.h.b16 %v131
      %v479 = vunpack.c.l.b16 %v132
      %v480 = vunpack.c.h.b16 %v132
      %v481 = vunpack.c.l.b16 %v133
      %v482 = vunpack.c.h.b16 %v133
      %v483 = vunpack.c.l.b16 %v134
      %v484 = vunpack.c.h.b16 %v134
      %v485 = vunpack.c.l.b16 %v135
      %v486 = vunpack.c.h.b16 %v135
      %v487 = vunpack.c.l.b16 %v136
      %v488 = vunpack.c.h.b16 %v136
      %v489 = vunpack.c.l.b16 %v137
      %v490 = vunpack.c.h.b16 %v137
      %v491 = vunpack.c.l.b16 %v138
      %v492 = vunpack.c.h.b16 %v138
      %v493 = vunpack.c.l.b16 %v139
      %v494 = vunpack.c.h.b16 %v139
      %v495 = vunpack.c.l.b16 %v140
      %v496 = vunpack.c.h.b16 %v140
      %v497 = vunpack.c.l.b16 %v141
      %v498 = vunpack.c.h.b16 %v141
      %v499 = vunpack.c.l.b16 %v142
      %v500 = vunpack.c.h.b16 %v142
      %v501 = vunpack.c.l.b16 %v143
      %v502 = vunpack.c.h.b16 %v143
      %v503 = vunpack.c.l.b16 %v144
      %v504 = vunpack.c.h.b16 %v144
      %v505 = vunpack.c.l.b16 %v145
      %v506 = vunpack.c.h.b16 %v145
      %v507 = vunpack.c.l.b16 %v146
      %v508 = vunpack.c.h.b16 %v146
      %v509 = vunpack.c.l.b16 %v147
      %v510 = vunpack.c.h.b16 %v147
      %v511 = vunpack.c.l.b16 %v148
      %v512 = vunpack.c.h.b16 %v148
      %v513 = vunpack.c.l.b16 %v149
      %v514 = vunpack.c.h.b16 %v149
      %v515 = vunpack.c.l.b16 %v150
      %v516 = vunpack.c.h.b16 %v150
      %v517 = vunpack.c.l.b16 %v151
      %v518 = vunpack.c.h.b16 %v151
      %v519 = vunpack.c.l.b16 %v152
      %v520 = vunpack.c.h.b16 %v152
      %v521 = vunpack.c.l.b16 %v153
      %v522 = vunpack.c.h.b16 %v153
      %v523 = vunpack.c.l.b16 %v154
      %v524 = vunpack.c.h.b16 %v154
      %v525 = vunpack.c.l.b16 %v155
      %v526 = vunpack.c.h.b16 %v155
      %v527 = vpack.c.b16 %v467, %v463
      %v528 = vpack.c.b16 %v468, %v464
      %v529 = vpack.c.b16 %v469, %v465
      %v530 = vpack.c.b16 %v470, %v466
      %v531 = vpack.c.b16 %v475, %v471
      %v532 = vpack.c.b16 %v476, %v472
      %v533 = vpack.c.b16 %v477, %v473
      %v534 = vpack.c.b16 %v478, %v474
      %v535 = vpack.c.b16 %v483, %v479
      %v536 = vpack.c.b16 %v484, %v480
      %v537 = vpack.c.b16 %v485, %v481
      %v538 = vpack.c.b16 %v486, %v482
      %v539 = vpack.c.b16 %v491, %v487
      %v540 = vpack.c.b16 %v492, %v488
      %v541 = vpack.c.b16 %v493, %v489
      %v542 = vpack.c.b16 %v494, %v490
      %v543 = vpack.c.b16 %v499, %v495
      %v544 = vpack.c.b16 %v500, %v496
      %v545 = vpack.c.b16 %v501, %v497
      %v546 = vpack.c.b16 %v502, %v498
      %v547 = vpack.c.b16 %v507, %v503
      %v548 = vpack.c.b16 %v508, %v504
      %v549 = vpack.c.b16 %v509, %v505
      %v550 = vpack.c.b16 %v510, %v506
      %v551 = vpack.c.b16 %v515, %v511
      %v552 = vpack.c.b16 %v516, %v512
      %v553 = vpack.c.b16 %v517, %v513
      %v554 = vpack.c.b16 %v518, %v514
      %v555 = vpack.c.b16 %v523, %v519
      %v556 = vpack.c.b16 %v524, %v520
      %v557 = vpack.c.b16 %v525, %v521
      %v558 = vpack.c.b16 %v526, %v522
      %591 = vmatprep.subr.bf16.mxu0 %v528
      %592 = vmatpush1.bf16.msra.mxu0 %v527
      %593 = vmatprep.subr.bf16.mxu0 %v532
      %594 = vmatpush1.bf16.msra.mxu0 %v531
      %595 = vmatprep.subr.bf16.mxu0 %v536
      %596 = vmatpush1.bf16.msra.mxu0 %v535
      %597 = vmatprep.subr.bf16.mxu0 %v540
      %598 = vmatpush1.bf16.msra.mxu0 %v539
      %599 = vmatprep.subr.bf16.mxu0 %v544
      %600 = vmatpush1.bf16.msra.mxu0 %v543
      %601 = vmatprep.subr.bf16.mxu0 %v548
      %602 = vmatpush1.bf16.msra.mxu0 %v547
      %603 = vmatprep.subr.bf16.mxu0 %v552
      %604 = vmatpush1.bf16.msra.mxu0 %v551
      %605 = vmatprep.subr.bf16.mxu0 %v556
      %606 = vmatpush1.bf16.msra.mxu0 %v555
      %607 = vmatprep.subr.bf16.mxu0 0
      %608 = vmatpush1.bf16.msra.mxu0 0
      %609 = vmatprep.subr.bf16.mxu0 0
      %610 = vmatpush1.bf16.msra.mxu0 0
      %611 = vmatprep.subr.bf16.mxu0 0
      %612 = vmatpush1.bf16.msra.mxu0 0
      %613 = vmatprep.subr.bf16.mxu0 0
      %614 = vmatpush1.bf16.msra.mxu0 0
      %615 = vmatprep.subr.bf16.mxu0 0
      %616 = vmatpush1.bf16.msra.mxu0 0
      %617 = vmatprep.subr.bf16.mxu0 0
      %618 = vmatpush1.bf16.msra.mxu0 0
      %619 = vmatprep.subr.bf16.mxu0 0
      %620 = vmatpush1.bf16.msra.mxu0 0
      %621 = vmatprep.subr.bf16.mxu0 0
      %622 = vmatpush1.bf16.msra.mxu0 0
      %623 = vmatprep.mubr.bf16.mxu0 0
      %624 = vmatmul.mubr.bf16.gmra.mrb[0].mxu0 %v120
      %v625 = vpop.f32.mrb[0].mxu0
      %v626 = vadd.f32 %v384, %v625
      %v627 = vpop.f32.mrb[0].mxu0
      %v628 = vadd.f32 %v386, %v627
      %v629 = vpop.f32.mrb[0].mxu0
      %v630 = vpop.f32.mrb[0].mxu0
      %631 = vdwg.mxu0
      %632 = vmatprep.subr.bf16.mxu0 %v530
      %633 = vmatpush1.bf16.msra.mxu0 %v529
      %634 = vmatprep.subr.bf16.mxu0 %v534
      %635 = vmatpush1.bf16.msra.mxu0 %v533
      %636 = vmatprep.subr.bf16.mxu0 %v538
      %637 = vmatpush1.bf16.msra.mxu0 %v537
      %638 = vmatprep.subr.bf16.mxu0 %v542
      %639 = vmatpush1.bf16.msra.mxu0 %v541
      %640 = vmatprep.subr.bf16.mxu0 %v546
      %641 = vmatpush1.bf16.msra.mxu0 %v545
      %642 = vmatprep.subr.bf16.mxu0 %v550
      %643 = vmatpush1.bf16.msra.mxu0 %v549
      %644 = vmatprep.subr.bf16.mxu0 %v554
      %645 = vmatpush1.bf16.msra.mxu0 %v553
      %646 = vmatprep.subr.bf16.mxu0 %v558
      %647 = vmatpush1.bf16.msra.mxu0 %v557
      %648 = vmatprep.subr.bf16.mxu0 0
      %649 = vmatpush1.bf16.msra.mxu0 0
      %650 = vmatprep.subr.bf16.mxu0 0
      %651 = vmatpush1.bf16.msra.mxu0 0
      %652 = vmatprep.subr.bf16.mxu0 0
      %653 = vmatpush1.bf16.msra.mxu0 0
      %654 = vmatprep.subr.bf16.mxu0 0
      %655 = vmatpush1.bf16.msra.mxu0 0
      %656 = vmatprep.subr.bf16.mxu0 0
      %657 = vmatpush1.bf16.msra.mxu0 0
      %658 = vmatprep.subr.bf16.mxu0 0
      %659 = vmatpush1.bf16.msra.mxu0 0
      %660 = vmatprep.subr.bf16.mxu0 0
      %661 = vmatpush1.bf16.msra.mxu0 0
      %662 = vmatprep.subr.bf16.mxu0 0
      %663 = vmatpush1.bf16.msra.mxu0 0
      %664 = vmatprep.mubr.bf16.mxu0 0
      %665 = vmatmul.mubr.bf16.gmra.mrb[0].mxu0 %v120
      %v666 = vpop.f32.mrb[0].mxu0
      %v667 = vadd.f32 %v425, %v666
      %v668 = vpop.f32.mrb[0].mxu0
      %v669 = vadd.f32 %v427, %v668
      %v670 = vpop.f32.mrb[0].mxu0
      %v671 = vpop.f32.mrb[0].mxu0
      %672 = vdwg.mxu0
      %v674 = vlaneseq
      %v675 = vshrl.u32 %v674, 7
      %v676 = vsub.s32 0, %v675
      %v677 = vrot.slane %v121, %v676
      %v678 = vlaneseq
      %v679 = vshrl.u32 %v678, 7
      %v680 = vsub.s32 1, %v679
      %v681 = vrot.slane %v121, %v680
      %v682 = vlaneseq
      %v683 = vshrl.u32 %v682, 7
      %v684 = vsub.s32 2, %v683
      %v685 = vrot.slane %v121, %v684
      %v686 = vlaneseq
      %v687 = vshrl.u32 %v686, 7
      %v688 = vsub.s32 3, %v687
      %v689 = vrot.slane %v121, %v688
      %v694 = vadd.f32 %v626, %v677
      %v695 = vadd.f32 %v628, %v681
      %v696 = vadd.f32 %v667, %v685
      %v697 = vadd.f32 %v669, %v689
      %v698 = vxor.u32 %v694, 2147483648
      %v699 = vmul.f32 %v698, 1.442695
      %v700 = vpow.pop %v699
      %v701 = vadd.f32 %v700, 1.0
      %v702 = vrcp.pop %v701
      %v703 = vmul.f32 1.0, %v702
      %v704 = vxor.u32 %v695, 2147483648
      %v705 = vmul.f32 %v704, 1.442695
      %v706 = vpow.pop %v705
      %v707 = vadd.f32 %v706, 1.0
      %v708 = vrcp.pop %v707
      %v709 = vmul.f32 1.0, %v708
      %v710 = vtanh.pop %v696
      %v711 = vxor.u32 %v697, 2147483648
      %v712 = vmul.f32 %v711, 1.442695
      %v713 = vpow.pop %v712
      %v714 = vadd.f32 %v713, 1.0
      %v715 = vrcp.pop %v714
      %v716 = vmul.f32 1.0, %v715
      %v717 = vmul.f32 %v709, %v123
      %v718 = vmul.f32 %v703, %v710
      %v719 = vadd.f32 %v717, %v718
      %v720 = vtanh.pop %v719
      %v721 = vmul.f32 %v716, %v720
      %722 = vst [vmem:[#allocation15] sm:$0xff] %v721
      %723 = vst [vmem:[#allocation17] sm:$0xff] %v719
      %v724 = vpack.c.bf16 %v721, %v721
      %v725 = vld [vmem:[#allocation12] sm:$0xf]
      %s726 = scalar_lea.vmem [#allocation3], 8
      %v727 = vld [vmem:[%s726] sm:$0xff]
      %s728 = scalar_lea.vmem [#allocation6], 8
      %v729 = vld [vmem:[%s728] sm:$0xff]
      %v730 = vld [vmem:[#allocation11] sm:$0xff]
      %v731 = vld [vmem:[#allocation11 + $0x8] sm:$0xff]
      %v732 = vld [vmem:[#allocation11 + $0x10] sm:$0xff]
      %v733 = vld [vmem:[#allocation11 + $0x18] sm:$0xff]
      %v734 = vld [vmem:[#allocation11 + $0x20] sm:$0xff]
      %v735 = vld [vmem:[#allocation11 + $0x28] sm:$0xff]
      %v736 = vld [vmem:[#allocation11 + $0x30] sm:$0xff]
      %v737 = vld [vmem:[#allocation11 + $0x38] sm:$0xff]
      %v738 = vld [vmem:[#allocation11 + $0x40] sm:$0xff]
      %v739 = vld [vmem:[#allocation11 + $0x48] sm:$0xff]
      %v740 = vld [vmem:[#allocation11 + $0x50] sm:$0xff]
      %v741 = vld [vmem:[#allocation11 + $0x58] sm:$0xff]
      %v742 = vld [vmem:[#allocation11 + $0x60] sm:$0xff]
      %v743 = vld [vmem:[#allocation11 + $0x68] sm:$0xff]
      %v744 = vld [vmem:[#allocation11 + $0x70] sm:$0xff]
      %v745 = vld [vmem:[#allocation11 + $0x78] sm:$0xff]
      %v746 = vld [vmem:[#allocation11 + $0x80] sm:$0xff]
      %v747 = vld [vmem:[#allocation11 + $0x88] sm:$0xff]
      %v748 = vld [vmem:[#allocation11 + $0x90] sm:$0xff]
      %v749 = vld [vmem:[#allocation11 + $0x98] sm:$0xff]
      %v750 = vld [vmem:[#allocation11 + $0xa0] sm:$0xff]
      %v751 = vld [vmem:[#allocation11 + $0xa8] sm:$0xff]
      %v752 = vld [vmem:[#allocation11 + $0xb0] sm:$0xff]
      %v753 = vld [vmem:[#allocation11 + $0xb8] sm:$0xff]
      %v754 = vld [vmem:[#allocation11 + $0xc0] sm:$0xff]
      %v755 = vld [vmem:[#allocation11 + $0xc8] sm:$0xff]
      %v756 = vld [vmem:[#allocation11 + $0xd0] sm:$0xff]
      %v757 = vld [vmem:[#allocation11 + $0xd8] sm:$0xff]
      %v758 = vld [vmem:[#allocation11 + $0xe0] sm:$0xff]
      %v759 = vld [vmem:[#allocation11 + $0xe8] sm:$0xff]
      %v760 = vld [vmem:[#allocation11 + $0xf0] sm:$0xff]
      %v761 = vld [vmem:[#allocation11 + $0xf8] sm:$0xff]
      %v762 = vpack.c.bf16 %v727, %v727
      %v763 = vld [vmem:[#allocation11 + $0x100] sm:$0xff]
      %v764 = vld [vmem:[#allocation11 + $0x108] sm:$0xff]
      %v765 = vld [vmem:[#allocation11 + $0x110] sm:$0xff]
      %v766 = vld [vmem:[#allocation11 + $0x118] sm:$0xff]
      %v767 = vld [vmem:[#allocation11 + $0x120] sm:$0xff]
      %v768 = vld [vmem:[#allocation11 + $0x128] sm:$0xff]
      %v769 = vld [vmem:[#allocation11 + $0x130] sm:$0xff]
      %v770 = vld [vmem:[#allocation11 + $0x138] sm:$0xff]
      %v771 = vld [vmem:[#allocation11 + $0x140] sm:$0xff]
      %v772 = vld [vmem:[#allocation11 + $0x148] sm:$0xff]
      %v773 = vld [vmem:[#allocation11 + $0x150] sm:$0xff]
      %v774 = vld [vmem:[#allocation11 + $0x158] sm:$0xff]
      %v775 = vld [vmem:[#allocation11 + $0x160] sm:$0xff]
      %v776 = vld [vmem:[#allocation11 + $0x168] sm:$0xff]
      %v777 = vld [vmem:[#allocation11 + $0x170] sm:$0xff]
      %v778 = vld [vmem:[#allocation11 + $0x178] sm:$0xff]
      %v779 = vld [vmem:[#allocation11 + $0x180] sm:$0xff]
      %v780 = vld [vmem:[#allocation11 + $0x188] sm:$0xff]
      %v781 = vld [vmem:[#allocation11 + $0x190] sm:$0xff]
      %v782 = vld [vmem:[#allocation11 + $0x198] sm:$0xff]
      %v783 = vld [vmem:[#allocation11 + $0x1a0] sm:$0xff]
      %v784 = vld [vmem:[#allocation11 + $0x1a8] sm:$0xff]
      %v785 = vld [vmem:[#allocation11 + $0x1b0] sm:$0xff]
      %v786 = vld [vmem:[#allocation11 + $0x1b8] sm:$0xff]
      %v787 = vld [vmem:[#allocation11 + $0x1c0] sm:$0xff]
      %v788 = vld [vmem:[#allocation11 + $0x1c8] sm:$0xff]
      %v789 = vld [vmem:[#allocation11 + $0x1d0] sm:$0xff]
      %v790 = vld [vmem:[#allocation11 + $0x1d8] sm:$0xff]
      %v791 = vld [vmem:[#allocation11 + $0x1e0] sm:$0xff]
      %v792 = vld [vmem:[#allocation11 + $0x1e8] sm:$0xff]
      %v793 = vld [vmem:[#allocation11 + $0x1f0] sm:$0xff]
      %v794 = vld [vmem:[#allocation11 + $0x1f8] sm:$0xff]
      %v827 = vunpack.c.l.b16 %v763
      %v828 = vunpack.c.h.b16 %v763
      %v829 = vunpack.c.l.b16 %v764
      %v830 = vunpack.c.h.b16 %v764
      %v831 = vunpack.c.l.b16 %v765
      %v832 = vunpack.c.h.b16 %v765
      %v833 = vunpack.c.l.b16 %v766
      %v834 = vunpack.c.h.b16 %v766
      %v835 = vunpack.c.l.b16 %v767
      %v836 = vunpack.c.h.b16 %v767
      %v837 = vunpack.c.l.b16 %v768
      %v838 = vunpack.c.h.b16 %v768
      %v839 = vunpack.c.l.b16 %v769
      %v840 = vunpack.c.h.b16 %v769
      %v841 = vunpack.c.l.b16 %v770
      %v842 = vunpack.c.h.b16 %v770
      %v843 = vunpack.c.l.b16 %v771
      %v844 = vunpack.c.h.b16 %v771
      %v845 = vunpack.c.l.b16 %v772
      %v846 = vunpack.c.h.b16 %v772
      %v847 = vunpack.c.l.b16 %v773
      %v848 = vunpack.c.h.b16 %v773
      %v849 = vunpack.c.l.b16 %v774
      %v850 = vunpack.c.h.b16 %v774
      %v851 = vunpack.c.l.b16 %v775
      %v852 = vunpack.c.h.b16 %v775
      %v853 = vunpack.c.l.b16 %v776
      %v854 = vunpack.c.h.b16 %v776
      %v855 = vunpack.c.l.b16 %v777
      %v856 = vunpack.c.h.b16 %v777
      %v857 = vunpack.c.l.b16 %v778
      %v858 = vunpack.c.h.b16 %v778
      %v859 = vunpack.c.l.b16 %v779
      %v860 = vunpack.c.h.b16 %v779
      %v861 = vunpack.c.l.b16 %v780
      %v862 = vunpack.c.h.b16 %v780
      %v863 = vunpack.c.l.b16 %v781
      %v864 = vunpack.c.h.b16 %v781
      %v865 = vunpack.c.l.b16 %v782
      %v866 = vunpack.c.h.b16 %v782
      %v867 = vunpack.c.l.b16 %v783
      %v868 = vunpack.c.h.b16 %v783
      %v869 = vunpack.c.l.b16 %v784
      %v870 = vunpack.c.h.b16 %v784
      %v871 = vunpack.c.l.b16 %v785
      %v872 = vunpack.c.h.b16 %v785
      %v873 = vunpack.c.l.b16 %v786
      %v874 = vunpack.c.h.b16 %v786
      %v875 = vunpack.c.l.b16 %v787
      %v876 = vunpack.c.h.b16 %v787
      %v877 = vunpack.c.l.b16 %v788
      %v878 = vunpack.c.h.b16 %v788
      %v879 = vunpack.c.l.b16 %v789
      %v880 = vunpack.c.h.b16 %v789
      %v881 = vunpack.c.l.b16 %v790
      %v882 = vunpack.c.h.b16 %v790
      %v883 = vunpack.c.l.b16 %v791
      %v884 = vunpack.c.h.b16 %v791
      %v885 = vunpack.c.l.b16 %v792
      %v886 = vunpack.c.h.b16 %v792
      %v887 = vunpack.c.l.b16 %v793
      %v888 = vunpack.c.h.b16 %v793
      %v889 = vunpack.c.l.b16 %v794
      %v890 = vunpack.c.h.b16 %v794
      %v891 = vpack.c.b16 %v831, %v827
      %v892 = vpack.c.b16 %v832, %v828
      %v893 = vpack.c.b16 %v833, %v829
      %v894 = vpack.c.b16 %v834, %v830
      %v895 = vpack.c.b16 %v839, %v835
      %v896 = vpack.c.b16 %v840, %v836
      %v897 = vpack.c.b16 %v841, %v837
      %v898 = vpack.c.b16 %v842, %v838
      %v899 = vpack.c.b16 %v847, %v843
      %v900 = vpack.c.b16 %v848, %v844
      %v901 = vpack.c.b16 %v849, %v845
      %v902 = vpack.c.b16 %v850, %v846
      %v903 = vpack.c.b16 %v855, %v851
      %v904 = vpack.c.b16 %v856, %v852
      %v905 = vpack.c.b16 %v857, %v853
      %v906 = vpack.c.b16 %v858, %v854
      %v907 = vpack.c.b16 %v863, %v859
      %v908 = vpack.c.b16 %v864, %v860
      %v909 = vpack.c.b16 %v865, %v861
      %v910 = vpack.c.b16 %v866, %v862
      %v911 = vpack.c.b16 %v871, %v867
      %v912 = vpack.c.b16 %v872, %v868
      %v913 = vpack.c.b16 %v873, %v869
      %v914 = vpack.c.b16 %v874, %v870
      %v915 = vpack.c.b16 %v879, %v875
      %v916 = vpack.c.b16 %v880, %v876
      %v917 = vpack.c.b16 %v881, %v877
      %v918 = vpack.c.b16 %v882, %v878
      %v919 = vpack.c.b16 %v887, %v883
      %v920 = vpack.c.b16 %v888, %v884
      %v921 = vpack.c.b16 %v889, %v885
      %v922 = vpack.c.b16 %v890, %v886
      %955 = vmatprep.subr.bf16.mxu0 %v892
      %956 = vmatpush1.bf16.msra.mxu0 %v891
      %957 = vmatprep.subr.bf16.mxu0 %v896
      %958 = vmatpush1.bf16.msra.mxu0 %v895
      %959 = vmatprep.subr.bf16.mxu0 %v900
      %960 = vmatpush1.bf16.msra.mxu0 %v899
      %961 = vmatprep.subr.bf16.mxu0 %v904
      %962 = vmatpush1.bf16.msra.mxu0 %v903
      %963 = vmatprep.subr.bf16.mxu0 %v908
      %964 = vmatpush1.bf16.msra.mxu0 %v907
      %965 = vmatprep.subr.bf16.mxu0 %v912
      %966 = vmatpush1.bf16.msra.mxu0 %v911
      %967 = vmatprep.subr.bf16.mxu0 %v916
      %968 = vmatpush1.bf16.msra.mxu0 %v915
      %969 = vmatprep.subr.bf16.mxu0 %v920
      %970 = vmatpush1.bf16.msra.mxu0 %v919
      %971 = vmatprep.subr.bf16.mxu0 0
      %972 = vmatpush1.bf16.msra.mxu0 0
      %973 = vmatprep.subr.bf16.mxu0 0
      %974 = vmatpush1.bf16.msra.mxu0 0
      %975 = vmatprep.subr.bf16.mxu0 0
      %976 = vmatpush1.bf16.msra.mxu0 0
      %977 = vmatprep.subr.bf16.mxu0 0
      %978 = vmatpush1.bf16.msra.mxu0 0
      %979 = vmatprep.subr.bf16.mxu0 0
      %980 = vmatpush1.bf16.msra.mxu0 0
      %981 = vmatprep.subr.bf16.mxu0 0
      %982 = vmatpush1.bf16.msra.mxu0 0
      %983 = vmatprep.subr.bf16.mxu0 0
      %984 = vmatpush1.bf16.msra.mxu0 0
      %985 = vmatprep.subr.bf16.mxu0 0
      %986 = vmatpush1.bf16.msra.mxu0 0
      %987 = vmatprep.mubr.bf16.mxu0 0
      %988 = vmatmul.mubr.bf16.gmra.mrb[0].mxu0 %v762
      %v989 = vpop.f32.mrb[0].mxu0
      %v990 = vadd.f32 0.0, %v989
      %v991 = vpop.f32.mrb[0].mxu0
      %v992 = vadd.f32 0.0, %v991
      %v993 = vpop.f32.mrb[0].mxu0
      %v994 = vpop.f32.mrb[0].mxu0
      %995 = vdwg.mxu0
      %996 = vmatprep.subr.bf16.mxu0 %v894
      %997 = vmatpush1.bf16.msra.mxu0 %v893
      %998 = vmatprep.subr.bf16.mxu0 %v898
      %999 = vmatpush1.bf16.msra.mxu0 %v897
      %1000 = vmatprep.subr.bf16.mxu0 %v902
      %1001 = vmatpush1.bf16.msra.mxu0 %v901
      %1002 = vmatprep.subr.bf16.mxu0 %v906
      %1003 = vmatpush1.bf16.msra.mxu0 %v905
      %1004 = vmatprep.subr.bf16.mxu0 %v910
      %1005 = vmatpush1.bf16.msra.mxu0 %v909
      %1006 = vmatprep.subr.bf16.mxu0 %v914
      %1007 = vmatpush1.bf16.msra.mxu0 %v913
      %1008 = vmatprep.subr.bf16.mxu0 %v918
      %1009 = vmatpush1.bf16.msra.mxu0 %v917
      %1010 = vmatprep.subr.bf16.mxu0 %v922
      %1011 = vmatpush1.bf16.msra.mxu0 %v921
      %1012 = vmatprep.subr.bf16.mxu0 0
      %1013 = vmatpush1.bf16.msra.mxu0 0
      %1014 = vmatprep.subr.bf16.mxu0 0
      %1015 = vmatpush1.bf16.msra.mxu0 0
      %1016 = vmatprep.subr.bf16.mxu0 0
      %1017 = vmatpush1.bf16.msra.mxu0 0
      %1018 = vmatprep.subr.bf16.mxu0 0
      %1019 = vmatpush1.bf16.msra.mxu0 0
      %1020 = vmatprep.subr.bf16.mxu0 0
      %1021 = vmatpush1.bf16.msra.mxu0 0
      %1022 = vmatprep.subr.bf16.mxu0 0
      %1023 = vmatpush1.bf16.msra.mxu0 0
      %1024 = vmatprep.subr.bf16.mxu0 0
      %1025 = vmatpush1.bf16.msra.mxu0 0
      %1026 = vmatprep.subr.bf16.mxu0 0
      %1027 = vmatpush1.bf16.msra.mxu0 0
      %1028 = vmatprep.mubr.bf16.mxu0 0
      %1029 = vmatmul.mubr.bf16.gmra.mrb[0].mxu0 %v762
      %v1030 = vpop.f32.mrb[0].mxu0
      %v1031 = vadd.f32 0.0, %v1030
      %v1032 = vpop.f32.mrb[0].mxu0
      %v1033 = vadd.f32 0.0, %v1032
      %v1034 = vpop.f32.mrb[0].mxu0
      %v1035 = vpop.f32.mrb[0].mxu0
      %1036 = vdwg.mxu0
      %v1069 = vunpack.c.l.b16 %v730
      %v1070 = vunpack.c.h.b16 %v730
      %v1071 = vunpack.c.l.b16 %v731
      %v1072 = vunpack.c.h.b16 %v731
      %v1073 = vunpack.c.l.b16 %v732
      %v1074 = vunpack.c.h.b16 %v732
      %v1075 = vunpack.c.l.b16 %v733
      %v1076 = vunpack.c.h.b16 %v733
      %v1077 = vunpack.c.l.b16 %v734
      %v1078 = vunpack.c.h.b16 %v734
      %v1079 = vunpack.c.l.b16 %v735
      %v1080 = vunpack.c.h.b16 %v735
      %v1081 = vunpack.c.l.b16 %v736
      %v1082 = vunpack.c.h.b16 %v736
      %v1083 = vunpack.c.l.b16 %v737
      %v1084 = vunpack.c.h.b16 %v737
      %v1085 = vunpack.c.l.b16 %v738
      %v1086 = vunpack.c.h.b16 %v738
      %v1087 = vunpack.c.l.b16 %v739
      %v1088 = vunpack.c.h.b16 %v739
      %v1089 = vunpack.c.l.b16 %v740
      %v1090 = vunpack.c.h.b16 %v740
      %v1091 = vunpack.c.l.b16 %v741
      %v1092 = vunpack.c.h.b16 %v741
      %v1093 = vunpack.c.l.b16 %v742
      %v1094 = vunpack.c.h.b16 %v742
      %v1095 = vunpack.c.l.b16 %v743
      %v1096 = vunpack.c.h.b16 %v743
      %v1097 = vunpack.c.l.b16 %v744
      %v1098 = vunpack.c.h.b16 %v744
      %v1099 = vunpack.c.l.b16 %v745
      %v1100 = vunpack.c.h.b16 %v745
      %v1101 = vunpack.c.l.b16 %v746
      %v1102 = vunpack.c.h.b16 %v746
      %v1103 = vunpack.c.l.b16 %v747
      %v1104 = vunpack.c.h.b16 %v747
      %v1105 = vunpack.c.l.b16 %v748
      %v1106 = vunpack.c.h.b16 %v748
      %v1107 = vunpack.c.l.b16 %v749
      %v1108 = vunpack.c.h.b16 %v749
      %v1109 = vunpack.c.l.b16 %v750
      %v1110 = vunpack.c.h.b16 %v750
      %v1111 = vunpack.c.l.b16 %v751
      %v1112 = vunpack.c.h.b16 %v751
      %v1113 = vunpack.c.l.b16 %v752
      %v1114 = vunpack.c.h.b16 %v752
      %v1115 = vunpack.c.l.b16 %v753
      %v1116 = vunpack.c.h.b16 %v753
      %v1117 = vunpack.c.l.b16 %v754
      %v1118 = vunpack.c.h.b16 %v754
      %v1119 = vunpack.c.l.b16 %v755
      %v1120 = vunpack.c.h.b16 %v755
      %v1121 = vunpack.c.l.b16 %v756
      %v1122 = vunpack.c.h.b16 %v756
      %v1123 = vunpack.c.l.b16 %v757
      %v1124 = vunpack.c.h.b16 %v757
      %v1125 = vunpack.c.l.b16 %v758
      %v1126 = vunpack.c.h.b16 %v758
      %v1127 = vunpack.c.l.b16 %v759
      %v1128 = vunpack.c.h.b16 %v759
      %v1129 = vunpack.c.l.b16 %v760
      %v1130 = vunpack.c.h.b16 %v760
      %v1131 = vunpack.c.l.b16 %v761
      %v1132 = vunpack.c.h.b16 %v761
      %v1133 = vpack.c.b16 %v1073, %v1069
      %v1134 = vpack.c.b16 %v1074, %v1070
      %v1135 = vpack.c.b16 %v1075, %v1071
      %v1136 = vpack.c.b16 %v1076, %v1072
      %v1137 = vpack.c.b16 %v1081, %v1077
      %v1138 = vpack.c.b16 %v1082, %v1078
      %v1139 = vpack.c.b16 %v1083, %v1079
      %v1140 = vpack.c.b16 %v1084, %v1080
      %v1141 = vpack.c.b16 %v1089, %v1085
      %v1142 = vpack.c.b16 %v1090, %v1086
      %v1143 = vpack.c.b16 %v1091, %v1087
      %v1144 = vpack.c.b16 %v1092, %v1088
      %v1145 = vpack.c.b16 %v1097, %v1093
      %v1146 = vpack.c.b16 %v1098, %v1094
      %v1147 = vpack.c.b16 %v1099, %v1095
      %v1148 = vpack.c.b16 %v1100, %v1096
      %v1149 = vpack.c.b16 %v1105, %v1101
      %v1150 = vpack.c.b16 %v1106, %v1102
      %v1151 = vpack.c.b16 %v1107, %v1103
      %v1152 = vpack.c.b16 %v1108, %v1104
      %v1153 = vpack.c.b16 %v1113, %v1109
      %v1154 = vpack.c.b16 %v1114, %v1110
      %v1155 = vpack.c.b16 %v1115, %v1111
      %v1156 = vpack.c.b16 %v1116, %v1112
      %v1157 = vpack.c.b16 %v1121, %v1117
      %v1158 = vpack.c.b16 %v1122, %v1118
      %v1159 = vpack.c.b16 %v1123, %v1119
      %v1160 = vpack.c.b16 %v1124, %v1120
      %v1161 = vpack.c.b16 %v1129, %v1125
      %v1162 = vpack.c.b16 %v1130, %v1126
      %v1163 = vpack.c.b16 %v1131, %v1127
      %v1164 = vpack.c.b16 %v1132, %v1128
      %1197 = vmatprep.subr.bf16.mxu0 %v1134
      %1198 = vmatpush1.bf16.msra.mxu0 %v1133
      %1199 = vmatprep.subr.bf16.mxu0 %v1138
      %1200 = vmatpush1.bf16.msra.mxu0 %v1137
      %1201 = vmatprep.subr.bf16.mxu0 %v1142
      %1202 = vmatpush1.bf16.msra.mxu0 %v1141
      %1203 = vmatprep.subr.bf16.mxu0 %v1146
      %1204 = vmatpush1.bf16.msra.mxu0 %v1145
      %1205 = vmatprep.subr.bf16.mxu0 %v1150
      %1206 = vmatpush1.bf16.msra.mxu0 %v1149
      %1207 = vmatprep.subr.bf16.mxu0 %v1154
      %1208 = vmatpush1.bf16.msra.mxu0 %v1153
      %1209 = vmatprep.subr.bf16.mxu0 %v1158
      %1210 = vmatpush1.bf16.msra.mxu0 %v1157
      %1211 = vmatprep.subr.bf16.mxu0 %v1162
      %1212 = vmatpush1.bf16.msra.mxu0 %v1161
      %1213 = vmatprep.subr.bf16.mxu0 0
      %1214 = vmatpush1.bf16.msra.mxu0 0
      %1215 = vmatprep.subr.bf16.mxu0 0
      %1216 = vmatpush1.bf16.msra.mxu0 0
      %1217 = vmatprep.subr.bf16.mxu0 0
      %1218 = vmatpush1.bf16.msra.mxu0 0
      %1219 = vmatprep.subr.bf16.mxu0 0
      %1220 = vmatpush1.bf16.msra.mxu0 0
      %1221 = vmatprep.subr.bf16.mxu0 0
      %1222 = vmatpush1.bf16.msra.mxu0 0
      %1223 = vmatprep.subr.bf16.mxu0 0
      %1224 = vmatpush1.bf16.msra.mxu0 0
      %1225 = vmatprep.subr.bf16.mxu0 0
      %1226 = vmatpush1.bf16.msra.mxu0 0
      %1227 = vmatprep.subr.bf16.mxu0 0
      %1228 = vmatpush1.bf16.msra.mxu0 0
      %1229 = vmatprep.mubr.bf16.mxu0 0
      %1230 = vmatmul.mubr.bf16.gmra.mrb[0].mxu0 %v724
      %v1231 = vpop.f32.mrb[0].mxu0
      %v1232 = vadd.f32 %v990, %v1231
      %v1233 = vpop.f32.mrb[0].mxu0
      %v1234 = vadd.f32 %v992, %v1233
      %v1235 = vpop.f32.mrb[0].mxu0
      %v1236 = vpop.f32.mrb[0].mxu0
      %1237 = vdwg.mxu0
      %1238 = vmatprep.subr.bf16.mxu0 %v1136
      %1239 = vmatpush1.bf16.msra.mxu0 %v1135
      %1240 = vmatprep.subr.bf16.mxu0 %v1140
      %1241 = vmatpush1.bf16.msra.mxu0 %v1139
      %1242 = vmatprep.subr.bf16.mxu0 %v1144
      %1243 = vmatpush1.bf16.msra.mxu0 %v1143
      %1244 = vmatprep.subr.bf16.mxu0 %v1148
      %1245 = vmatpush1.bf16.msra.mxu0 %v1147
      %1246 = vmatprep.subr.bf16.mxu0 %v1152
      %1247 = vmatpush1.bf16.msra.mxu0 %v1151
      %1248 = vmatprep.subr.bf16.mxu0 %v1156
      %1249 = vmatpush1.bf16.msra.mxu0 %v1155
      %1250 = vmatprep.subr.bf16.mxu0 %v1160
      %1251 = vmatpush1.bf16.msra.mxu0 %v1159
      %1252 = vmatprep.subr.bf16.mxu0 %v1164
      %1253 = vmatpush1.bf16.msra.mxu0 %v1163
      %1254 = vmatprep.subr.bf16.mxu0 0
      %1255 = vmatpush1.bf16.msra.mxu0 0
      %1256 = vmatprep.subr.bf16.mxu0 0
      %1257 = vmatpush1.bf16.msra.mxu0 0
      %1258 = vmatprep.subr.bf16.mxu0 0
      %1259 = vmatpush1.bf16.msra.mxu0 0
      %1260 = vmatprep.subr.bf16.mxu0 0
      %1261 = vmatpush1.bf16.msra.mxu0 0
      %1262 = vmatprep.subr.bf16.mxu0 0
      %1263 = vmatpush1.bf16.msra.mxu0 0
      %1264 = vmatprep.subr.bf16.mxu0 0
      %1265 = vmatpush1.bf16.msra.mxu0 0
      %1266 = vmatprep.subr.bf16.mxu0 0
      %1267 = vmatpush1.bf16.msra.mxu0 0
      %1268 = vmatprep.subr.bf16.mxu0 0
      %1269 = vmatpush1.bf16.msra.mxu0 0
      %1270 = vmatprep.mubr.bf16.mxu0 0
      %1271 = vmatmul.mubr.bf16.gmra.mrb[0].mxu0 %v724
      %v1272 = vpop.f32.mrb[0].mxu0
      %v1273 = vadd.f32 %v1031, %v1272
      %v1274 = vpop.f32.mrb[0].mxu0
      %v1275 = vadd.f32 %v1033, %v1274
      %v1276 = vpop.f32.mrb[0].mxu0
      %v1277 = vpop.f32.mrb[0].mxu0
      %1278 = vdwg.mxu0
      %v1280 = vlaneseq
      %v1281 = vshrl.u32 %v1280, 7
      %v1282 = vsub.s32 0, %v1281
      %v1283 = vrot.slane %v725, %v1282
      %v1284 = vlaneseq
      %v1285 = vshrl.u32 %v1284, 7
      %v1286 = vsub.s32 1, %v1285
      %v1287 = vrot.slane %v725, %v1286
      %v1288 = vlaneseq
      %v1289 = vshrl.u32 %v1288, 7
      %v1290 = vsub.s32 2, %v1289
      %v1291 = vrot.slane %v725, %v1290
      %v1292 = vlaneseq
      %v1293 = vshrl.u32 %v1292, 7
      %v1294 = vsub.s32 3, %v1293
      %v1295 = vrot.slane %v725, %v1294
      %v1300 = vadd.f32 %v1232, %v1283
      %v1301 = vadd.f32 %v1234, %v1287
      %v1302 = vadd.f32 %v1273, %v1291
      %v1303 = vadd.f32 %v1275, %v1295
      %v1304 = vxor.u32 %v1300, 2147483648
      %v1305 = vmul.f32 %v1304, 1.442695
      %v1306 = vpow.pop %v1305
      %v1307 = vadd.f32 %v1306, 1.0
      %v1308 = vrcp.pop %v1307
      %v1309 = vmul.f32 1.0, %v1308
      %v1310 = vxor.u32 %v1301, 2147483648
      %v1311 = vmul.f32 %v1310, 1.442695
      %v1312 = vpow.pop %v1311
      %v1313 = vadd.f32 %v1312, 1.0
      %v1314 = vrcp.pop %v1313
      %v1315 = vmul.f32 1.0, %v1314
      %v1316 = vtanh.pop %v1302
      %v1317 = vxor.u32 %v1303, 2147483648
      %v1318 = vmul.f32 %v1317, 1.442695
      %v1319 = vpow.pop %v1318
      %v1320 = vadd.f32 %v1319, 1.0
      %v1321 = vrcp.pop %v1320
      %v1322 = vmul.f32 1.0, %v1321
      %v1323 = vmul.f32 %v1315, %v729
      %v1324 = vmul.f32 %v1309, %v1316
      %v1325 = vadd.f32 %v1323, %v1324
      %v1326 = vtanh.pop %v1325
      %v1327 = vmul.f32 %v1322, %v1326
      %s1328 = scalar_lea.vmem [#allocation15], 8
      %1329 = vst [vmem:[%s1328] sm:$0xff] %v1327
      %s1330 = scalar_lea.vmem [#allocation17], 8
      %1331 = vst [vmem:[%s1330] sm:$0xff] %v1325
      %v1332 = vpack.c.bf16 %v1327, %v1327
      %1333 = vst [vmem:[#allocation2] sm:$0xf] %v1332
    $region65: #{tpu_custom_call.1} parent=1 // pred_fallthru
      _
    %v1334 = vld [vmem:[#allocation2] sm:$0xf]
    %v1335 = vld [vmem:[%s7] sm:$0xf]
    %v1336 = vld [vmem:[%s7 + $0x4] sm:$0xf]
    %v1337 = vld [vmem:[%s7 + $0x8] sm:$0xf]
    %v1338 = vld [vmem:[%s7 + $0xc] sm:$0xf]
    %v1339 = vld [vmem:[%s7 + $0x10] sm:$0xf]
    %v1340 = vld [vmem:[%s7 + $0x14] sm:$0xf]
    %v1341 = vld [vmem:[%s7 + $0x18] sm:$0xf]
    %v1342 = vld [vmem:[%s7 + $0x1c] sm:$0xf]
    %v1343 = vld [vmem:[%s7 + $0x20] sm:$0xf]
    %v1344 = vld [vmem:[%s7 + $0x24] sm:$0xf]
    %v1345 = vld [vmem:[%s7 + $0x28] sm:$0xf]
    %v1346 = vld [vmem:[%s7 + $0x2c] sm:$0xf]
    %v1347 = vld [vmem:[%s7 + $0x30] sm:$0xf]
    %v1348 = vld [vmem:[%s7 + $0x34] sm:$0xf]
    %v1349 = vld [vmem:[%s7 + $0x38] sm:$0xf]
    %v1350 = vld [vmem:[%s7 + $0x3c] sm:$0xf]
    %v1351 = vld [vmem:[%s8] sm:$0x1]
    %v1353 = vlaneseq
    %v1354 = vshrl.u32 %v1353, 7
    %v1355 = vsub.s32 0, %v1354
    %v1356 = vrot.slane %v1351, %v1355
    %v1374 = vunpack.c.l.b16 %v1335
    %v1375 = vunpack.c.l.b16 %v1336
    %v1376 = vunpack.c.l.b16 %v1337
    %v1377 = vunpack.c.l.b16 %v1338
    %v1378 = vunpack.c.l.b16 %v1339
    %v1379 = vunpack.c.l.b16 %v1340
    %v1380 = vunpack.c.l.b16 %v1341
    %v1381 = vunpack.c.l.b16 %v1342
    %v1382 = vunpack.c.l.b16 %v1343
    %v1383 = vunpack.c.l.b16 %v1344
    %v1384 = vunpack.c.l.b16 %v1345
    %v1385 = vunpack.c.l.b16 %v1346
    %v1386 = vunpack.c.l.b16 %v1347
    %v1387 = vunpack.c.l.b16 %v1348
    %v1388 = vunpack.c.l.b16 %v1349
    %v1389 = vunpack.c.l.b16 %v1350
    %v1390 = vpack.c.b16 %v1375, %v1374
    %v1391 = vpack.c.b16 %v1377, %v1376
    %v1392 = vpack.c.b16 %v1379, %v1378
    %v1393 = vpack.c.b16 %v1381, %v1380
    %v1394 = vpack.c.b16 %v1383, %v1382
    %v1395 = vpack.c.b16 %v1385, %v1384
    %v1396 = vpack.c.b16 %v1387, %v1386
    %v1397 = vpack.c.b16 %v1389, %v1388
    %1406 = vmatprep.subr.bf16.mxu0 0
    %1407 = vmatpush1.bf16.msra.mxu0 %v1390
    %1408 = vmatprep.subr.bf16.mxu0 0
    %1409 = vmatpush1.bf16.msra.mxu0 %v1391
    %1410 = vmatprep.subr.bf16.mxu0 0
    %1411 = vmatpush1.bf16.msra.mxu0 %v1392
    %1412 = vmatprep.subr.bf16.mxu0 0
    %1413 = vmatpush1.bf16.msra.mxu0 %v1393
    %1414 = vmatprep.subr.bf16.mxu0 0
    %1415 = vmatpush1.bf16.msra.mxu0 %v1394
    %1416 = vmatprep.subr.bf16.mxu0 0
    %1417 = vmatpush1.bf16.msra.mxu0 %v1395
    %1418 = vmatprep.subr.bf16.mxu0 0
    %1419 = vmatpush1.bf16.msra.mxu0 %v1396
    %1420 = vmatprep.subr.bf16.mxu0 0
    %1421 = vmatpush1.bf16.msra.mxu0 %v1397
    %1422 = vmatprep.subr.bf16.mxu0 0
    %1423 = vmatpush1.bf16.msra.mxu0 0
    %1424 = vmatprep.subr.bf16.mxu0 0
    %1425 = vmatpush1.bf16.msra.mxu0 0
    %1426 = vmatprep.subr.bf16.mxu0 0
    %1427 = vmatpush1.bf16.msra.mxu0 0
    %1428 = vmatprep.subr.bf16.mxu0 0
    %1429 = vmatpush1.bf16.msra.mxu0 0
    %1430 = vmatprep.subr.bf16.mxu0 0
    %1431 = vmatpush1.bf16.msra.mxu0 0
    %1432 = vmatprep.subr.bf16.mxu0 0
    %1433 = vmatpush1.bf16.msra.mxu0 0
    %1434 = vmatprep.subr.bf16.mxu0 0
    %1435 = vmatpush1.bf16.msra.mxu0 0
    %1436 = vmatprep.subr.bf16.mxu0 0
    %1437 = vmatpush1.bf16.msra.mxu0 0
    %1438 = vmatprep.mubr.bf16.mxu0 0
    %1439 = vmatmul.mubr.bf16.gmra.mrb[0].mxu0 %v1334
    %v1440 = vpop.f32.mrb[0].mxu0
    %v1441 = vadd.f32 %v1356, %v1440
    %v1442 = vpop.f32.mrb[0].mxu0
    %v1443 = vpop.f32.mrb[0].mxu0
    %v1444 = vpop.f32.mrb[0].mxu0
    %1445 = vdwg.mxu0
    %1446 = vst [vmem:[#allocation14] sm:$0xff] %v1441
    // Predicated region
    $region66: #{tpu_custom_call.1} parent=1 // pred_check
      _
    $region67: #{tpu_custom_call.1} parent=1 // pred_check_branch
      %1448 = sbr.rel (0) target = $region69
    $region68: #{tpu_custom_call.1} parent=1 // pred_region
      %s1450 = ssub.s32 128, 128
      %1451 = vsyncadd [#allocation5], %s1450
      %s1453 = sshll.u32 [#allocation14], 4
      %s1454 = int_to_ptr.vmem [resolvable:$true] %s1453
      %1456 = dma.vmem_to_hbm [thread:$0]  %s1454, 128, %s9, [#allocation5]
    $region69: #{tpu_custom_call.1} parent=1 // pred_fallthru
      _
    // Predicated region
    $region70: #{tpu_custom_call.1} parent=1 // pred_check
      _
    $region71: #{tpu_custom_call.1} parent=1 // pred_check_branch
      %1458 = sbr.rel (0) target = $region73
    $region72: #{tpu_custom_call.1} parent=1 // pred_region
      %s1460 = ssub.s32 256, 256
      %1461 = vsyncadd [#allocation16], %s1460
      %s1462 = sshll.u32 [#allocation15], 4
      %s1463 = int_to_ptr.vmem [resolvable:$true] %s1462
      %1468 = dma.vmem_to_hbm [thread:$0]  %s1463, 256, %s10, [#allocation16], 128, 128, 8
    $region73: #{tpu_custom_call.1} parent=1 // pred_fallthru
      _
    // Predicated region
    $region74: #{tpu_custom_call.1} parent=1 // pred_check
      _
    $region75: #{tpu_custom_call.1} parent=1 // pred_check_branch
      %1470 = sbr.rel (0) target = $region77
    $region76: #{tpu_custom_call.1} parent=1 // pred_region
      %s1472 = ssub.s32 256, 256
      %1473 = vsyncadd [#allocation16], %s1472
      %s1474 = sshll.u32 [#allocation17], 4
      %s1475 = int_to_ptr.vmem [resolvable:$true] %s1474
      %1480 = dma.vmem_to_hbm [thread:$0]  %s1475, 256, %s11, [#allocation16], 128, 128, 8
    $region77: #{tpu_custom_call.1} parent=1 // pred_fallthru
      _
    // Predicated region
    $region78: #{tpu_custom_call.1} parent=1 // pred_check
      _
    $region79: #{tpu_custom_call.1} parent=1 // pred_check_branch
      %1482 = sbr.rel (0) target = $region81
    $region80: #{tpu_custom_call.1} parent=1 // pred_region
      %1483 = dma.done [#allocation5], 128
    $region81: #{tpu_custom_call.1} parent=1 // pred_fallthru
      _
    // Predicated region
    $region82: #{tpu_custom_call.1} parent=1 // pred_check
      _
    $region83: #{tpu_custom_call.1} parent=1 // pred_check_branch
      %1485 = sbr.rel (0) target = $region85
    $region84: #{tpu_custom_call.1} parent=1 // pred_region
      %1486 = dma.done [#allocation16], 256
    $region85: #{tpu_custom_call.1} parent=1 // pred_fallthru
      _
    // Predicated region
    $region86: #{tpu_custom_call.1} parent=1 // pred_check
      _
    $region87: #{tpu_custom_call.1} parent=1 // pred_check_branch
      %1488 = sbr.rel (0) target = $region89
    $region88: #{tpu_custom_call.1} parent=1 // pred_region
      %1489 = dma.done [#allocation16], 256
    $region89: #{tpu_custom_call.1} parent=1 // pred_fallthru
      _
    %1490 = vsyncpa [#allocation4], 1
    %1491 = vsyncpa [#allocation7], 1
    %1492 = vsyncpa [#allocation10], 1
    %1493 = vsyncpa [#allocation13], 1
    %1494 = vsyncpa [#allocation5], 1
    %1495 = vsyncpa [#allocation16], 1

</llo_original>
